<compile_context>
chip_gen: v6e
topology: v6e:2x2x1
jax: 0.10.0
libtpu: 0.0.40
codegen_flags: <defaults>
</compile_context>

<pallas_src>
import functools
import math

import jax
import jax.numpy as jnp
from jax import lax
from jax.experimental import pallas as pl
from jax.experimental.pallas import tpu as pltpu


_VMEM_LIMIT = 32 * 1024 * 1024   # explicit scoped budget; safe on v5e/v6e/v7x
_LN_EPS = 1e-5                   # GPT2 layer_norm_epsilon


# ------------------------------ in-kernel helpers ----------------------------

def _gelu_new(x):
    # GPT2 "gelu_new" (tanh approximation), computed in f32.
    return 0.5 * x * (1.0 + jnp.tanh(
        math.sqrt(2.0 / math.pi) * (x + 0.044715 * x * x * x)))


def _layernorm_f32(x, g, b):
    # x: (rows, E) f32; g, b: (1, E)
    mu = jnp.mean(x, axis=-1, keepdims=True)
    var = jnp.mean(jnp.square(x - mu), axis=-1, keepdims=True)
    return (x - mu) * lax.rsqrt(var + _LN_EPS) * g.astype(jnp.float32) \
        + b.astype(jnp.float32)


# --------------------- kernel A: read_in + positional embed ------------------

def _read_in_kernel(zs_ref, w_ref, b_ref, wpe_ref, o_ref):
    # zs_ref: (1, T, D); w_ref: (D, E); wpe_ref: (T, E)
    z = zs_ref[0].astype(jnp.float32)                               # (T, D)
    w = w_ref[...].astype(jnp.float32)                              # (D, E)
    acc = wpe_ref[...].astype(jnp.float32) + b_ref[...].astype(jnp.float32)
    # VPU broadcast-FMA over the (small) input dimension: avoids an MXU
    # contraction with K = n_dims (~1-3% MXU fill) and a lane-padded operand.
    for d in range(z.shape[1]):
        acc = acc + z[:, d:d + 1] * w[d:d + 1, :]
    o_ref[0] = acc.astype(o_ref.dtype)


def read_in(zs, w, b, wpe_T, out_dtype):
    """h = zs @ w + b + wpe.  zs:(B,T,D), w:(D,E), wpe_T:(T,E) -> (B,T,E)."""
    B, T, D = zs.shape
    E = w.shape[1]
    return pl.pallas_call(
        _read_in_kernel,
        out_shape=jax.ShapeDtypeStruct((B, T, E), out_dtype),
        grid=(B,),
        in_specs=[
            pl.BlockSpec((1, T, D), lambda bi: (bi, 0, 0)),
            pl.BlockSpec((D, E), lambda bi: (0, 0)),
            pl.BlockSpec((1, E), lambda bi: (0, 0)),
            pl.BlockSpec((T, E), lambda bi: (0, 0)),
        ],
        out_specs=pl.BlockSpec((1, T, E), lambda bi: (bi, 0, 0)),
        compiler_params=pltpu.CompilerParams(
            dimension_semantics=("parallel",),
            vmem_limit_bytes=_VMEM_LIMIT),
        cost_estimate=pl.CostEstimate(
            flops=2 * B * T * D * E + 2 * B * T * E,
            transcendentals=0,
            bytes_accessed=B * T * D * 4 + D * E * 4 + T * E * 4
                           + 2 * B * T * E),
    )(zs, w, b.reshape(1, E), wpe_T)


# ------------- kernel B: fused LN1 -> c_attn -> attention -> proj ------------

def _attn_block_kernel(h_ref, g_ref, b_ref, wqkv_ref, bqkv_ref,
                       wproj_ref, bproj_ref, o_ref, *, n_head):
    T, E = h_ref.shape[1], h_ref.shape[2]
    H = n_head
    Dh = E // H
    scale = 1.0 / math.sqrt(Dh)

    x = h_ref[0].astype(jnp.float32)                                # (T, E)
    xn = _layernorm_f32(x, g_ref[...], b_ref[...])
    qkv = jnp.dot(xn.astype(wqkv_ref.dtype), wqkv_ref[...],
                  preferred_element_type=jnp.float32)               # (T, 3E)
    qkv = (qkv + bqkv_ref[...].astype(jnp.float32)).astype(jnp.bfloat16)

    row = lax.broadcasted_iota(jnp.int32, (T, T), 0)
    col = lax.broadcasted_iota(jnp.int32, (T, T), 1)
    causal = col <= row

    # Per-head causal attention; static unroll, each head uses 2-D MXU matmuls
    # (q @ k^T with a transposed-contraction dot_general, no in-kernel 3-D
    # transposes). Heads are re-merged with a lane-axis concatenate so the
    # final store stays lane-dense at width E.
    # TODO(synk): for very long sequences (T >~ 1k) switch to a flash-style
    # q-tiled online softmax so the (T, T) f32 score tile stays within VMEM.
    head_outs = []
    for hh in range(H):
        qh = qkv[:, hh * Dh:(hh + 1) * Dh]                          # (T, Dh)
        kh = qkv[:, E + hh * Dh:E + (hh + 1) * Dh]                  # (T, Dh)
        vh = qkv[:, 2 * E + hh * Dh:2 * E + (hh + 1) * Dh]          # (T, Dh)
        s = lax.dot_general(qh, kh, (((1,), (1,)), ((), ())),
                            preferred_element_type=jnp.float32) * scale
        s = jnp.where(causal, s, jnp.float32(-1e30))                # f32 scores
        s = s - jnp.max(s, axis=-1, keepdims=True)
        p = jnp.exp(s)
        p = p / jnp.sum(p, axis=-1, keepdims=True)
        head_outs.append(jnp.dot(p.astype(vh.dtype), vh,
                                 preferred_element_type=jnp.float32))
    a = head_outs[0] if H == 1 else jnp.concatenate(head_outs, axis=1)  # (T, E)

    y = jnp.dot(a.astype(wproj_ref.dtype), wproj_ref[...],
                preferred_element_type=jnp.float32)
    y = y + bproj_ref[...].astype(jnp.float32) + x                  # + residual
    o_ref[0] = y.astype(o_ref.dtype)


def attn_block(h, g, b, w_qkv, b_qkv, w_proj, b_proj, n_head):
    """h + attn_proj(causal_mha(c_attn(LN(h)))).  h: (B, T, E)."""
    B, T, E = h.shape
    Dh = E // n_head
    kern = functools.partial(_attn_block_kernel, n_head=n_head)
    flops = B * (2 * T * E * 3 * E + 4 * T * T * E + 2 * T * E * E)
    return pl.pallas_call(
        kern,
        out_shape=jax.ShapeDtypeStruct((B, T, E), h.dtype),
        grid=(B,),
        in_specs=[
            pl.BlockSpec((1, T, E), lambda bi: (bi, 0, 0)),
            pl.BlockSpec((1, E), lambda bi: (0, 0)),
            pl.BlockSpec((1, E), lambda bi: (0, 0)),
            pl.BlockSpec((E, 3 * E), lambda bi: (0, 0)),
            pl.BlockSpec((1, 3 * E), lambda bi: (0, 0)),
            pl.BlockSpec((E, E), lambda bi: (0, 0)),
            pl.BlockSpec((1, E), lambda bi: (0, 0)),
        ],
        out_specs=pl.BlockSpec((1, T, E), lambda bi: (bi, 0, 0)),
        compiler_params=pltpu.CompilerParams(
            dimension_semantics=("parallel",),
            vmem_limit_bytes=_VMEM_LIMIT),
        cost_estimate=pl.CostEstimate(
            flops=flops,
            transcendentals=B * n_head * T * T + B * T,
            bytes_accessed=2 * B * T * E * 2 + (3 * E * E + E * E) * 2
                           + (4 * E + 2 * E) * 4),
    )(h, g.reshape(1, E), b.reshape(1, E), w_qkv, b_qkv.reshape(1, 3 * E),
      w_proj, b_proj.reshape(1, E))


# --------------- kernel C: fused LN2 -> c_fc -> gelu -> mlp_proj -------------

def _mlp_block_kernel(h_ref, g_ref, b_ref, wfc_ref, bfc_ref,
                      wproj_ref, bproj_ref, o_ref):
    x = h_ref[0].astype(jnp.float32)                                # (T, E)
    xn = _layernorm_f32(x, g_ref[...], b_ref[...])
    m = jnp.dot(xn.astype(wfc_ref.dtype), wfc_ref[...],
                preferred_element_type=jnp.float32)                 # (T, 4E)
    m = _gelu_new(m + bfc_ref[...].astype(jnp.float32))
    y = jnp.dot(m.astype(wproj_ref.dtype), wproj_ref[...],
                preferred_element_type=jnp.float32)                 # (T, E)
    y = y + bproj_ref[...].astype(jnp.float32) + x                  # + residual
    o_ref[0] = y.astype(o_ref.dtype)


def mlp_block(h, g, b, w_fc, b_fc, w_proj, b_proj):
    """h + mlp_proj(gelu(c_fc(LN(h)))).  h: (B, T, E)."""
    B, T, E = h.shape
    F = w_fc.shape[1]
    return pl.pallas_call(
        _mlp_block_kernel,
        out_shape=jax.ShapeDtypeStruct((B, T, E), h.dtype),
        grid=(B,),
        in_specs=[
            pl.BlockSpec((1, T, E), lambda bi: (bi, 0, 0)),
            pl.BlockSpec((1, E), lambda bi: (0, 0)),
            pl.BlockSpec((1, E), lambda bi: (0, 0)),
            pl.BlockSpec((E, F), lambda bi: (0, 0)),
            pl.BlockSpec((1, F), lambda bi: (0, 0)),
            pl.BlockSpec((F, E), lambda bi: (0, 0)),
            pl.BlockSpec((1, E), lambda bi: (0, 0)),
        ],
        out_specs=pl.BlockSpec((1, T, E), lambda bi: (bi, 0, 0)),
        compiler_params=pltpu.CompilerParams(
            dimension_semantics=("parallel",),
            vmem_limit_bytes=_VMEM_LIMIT),
        cost_estimate=pl.CostEstimate(
            flops=4 * B * T * E * F,
            transcendentals=B * T * F + B * T,
            bytes_accessed=2 * B * T * E * 2 + 2 * E * F * 2
                           + (F + 3 * E) * 4),
    )(h, g.reshape(1, E), b.reshape(1, E), w_fc, b_fc.reshape(1, F),
      w_proj, b_proj.reshape(1, E))


# ------------------ kernel D: fused ln_f -> read_out (lane-padded) -----------

def _read_out_kernel(h_ref, g_ref, b_ref, w_ref, bias_ref, o_ref):
    x = h_ref[0].astype(jnp.float32)
    xn = _layernorm_f32(x, g_ref[...], b_ref[...])
    y = jnp.dot(xn.astype(w_ref.dtype), w_ref[...],
                preferred_element_type=jnp.float32)
    o_ref[0] = y + bias_ref[...].astype(jnp.float32)


def read_out(h, g, b, w_pad, b_pad):
    """LN_f(h) @ w_pad + b_pad.  w is (E, 128); column 0 is the real output."""
    B, T, E = h.shape
    N = w_pad.shape[1]
    return pl.pallas_call(
        _read_out_kernel,
        out_shape=jax.ShapeDtypeStruct((B, T, N), jnp.float32),
        grid=(B,),
        in_specs=[
            pl.BlockSpec((1, T, E), lambda bi: (bi, 0, 0)),
            pl.BlockSpec((1, E), lambda bi: (0, 0)),
            pl.BlockSpec((1, E), lambda bi: (0, 0)),
            pl.BlockSpec((E, N), lambda bi: (0, 0)),
            pl.BlockSpec((1, N), lambda bi: (0, 0)),
        ],
        out_specs=pl.BlockSpec((1, T, N), lambda bi: (bi, 0, 0)),
        compiler_params=pltpu.CompilerParams(
            dimension_semantics=("parallel",),
            vmem_limit_bytes=_VMEM_LIMIT),
        cost_estimate=pl.CostEstimate(
            flops=2 * B * T * E * N,
            transcendentals=B * T,
            bytes_accessed=B * T * E * 2 + E * N * 2 + B * T * N * 4),
    )(h, g.reshape(1, E), b.reshape(1, E), w_pad, b_pad.reshape(1, N))


# ------------------------------ model (glue) ---------------------------------

def combine(xs, ys):
    """Interleave x's and y's into a single sequence (same as PyTorch _combine)."""
    B, P, D = xs.shape
    ys_wide = jnp.concatenate(
        [ys[..., None], jnp.zeros((B, P, D - 1), xs.dtype)], axis=2)
    zs = jnp.stack([xs, ys_wide], axis=2).reshape(B, 2 * P, D)
    return zs


def init_params(key, n_dims, n_positions, n_embd, n_layer, n_head):
    E = n_embd
    w_dt = jnp.bfloat16                       # MXU-input weights in bf16
    keys = jax.random.split(key, 3 + n_layer)

    def normal(k, shape, std=0.02):
        return (std * jax.random.normal(k, shape)).astype(jnp.float32)

    read_out_w = normal(keys[2], (E, 1))
    params = {
        "read_in_w": normal(keys[0], (n_dims, E)),      # f32: used on the VPU
        "read_in_b": jnp.zeros((E,), jnp.float32),
        "wpe": normal(keys[1], (2 * n_positions, E)),
        # N=1 read_out padded to a lane-dense N=128 (column 0 is the real one).
        "read_out_w_pad": jnp.pad(read_out_w, ((0, 0), (0, 127))).astype(w_dt),
        "read_out_b_pad": jnp.zeros((128,), jnp.float32),
        "ln_f_g": jnp.ones((E,), jnp.float32),
        "ln_f_b": jnp.zeros((E,), jnp.float32),
        "layers": [],
    }
    for l in range(n_layer):
        lk = jax.random.split(keys[3 + l], 4)
        params["layers"].append({
            "ln1_g": jnp.ones((E,), jnp.float32),
            "ln1_b": jnp.zeros((E,), jnp.float32),
            "c_attn_w": normal(lk[0], (E, 3 * E)).astype(w_dt),
            "c_attn_b": jnp.zeros((3 * E,), jnp.float32),
            "attn_proj_w": normal(lk[1], (E, E)).astype(w_dt),
            "attn_proj_b": jnp.zeros((E,), jnp.float32),
            "ln2_g": jnp.ones((E,), jnp.float32),
            "ln2_b": jnp.zeros((E,), jnp.float32),
            "c_fc_w": normal(lk[2], (E, 4 * E)).astype(w_dt),
            "c_fc_b": jnp.zeros((4 * E,), jnp.float32),
            "mlp_proj_w": normal(lk[3], (4 * E, E)).astype(w_dt),
            "mlp_proj_b": jnp.zeros((E,), jnp.float32),
        })
    return params


def transformer_forward(params, xs, ys, n_head):
    # NOTE: residual stream carried in bf16; matches MXU input dtype but will
    # drift slightly from an f32 PyTorch reference — compare with tolerance.
    B, P, D = xs.shape
    T = 2 * P
    act_dt = jnp.bfloat16

    zs = combine(xs, ys)                               # (B, T, D) f32
    wpe_T = params["wpe"][:T]                          # (T, E), no broadcast

    # _read_in fused with the positional-embedding add
    h = read_in(zs, params["read_in_w"], params["read_in_b"], wpe_T, act_dt)

    for lp in params["layers"]:
        h = attn_block(h, lp["ln1_g"], lp["ln1_b"],
                       lp["c_attn_w"], lp["c_attn_b"],
                       lp["attn_proj_w"], lp["attn_proj_b"], n_head)
        h = mlp_block(h, lp["ln2_g"], lp["ln2_b"],
                      lp["c_fc_w"], lp["c_fc_b"],
                      lp["mlp_proj_w"], lp["mlp_proj_b"])

    pred = read_out(h, params["ln_f_g"], params["ln_f_b"],
                    params["read_out_w_pad"], params["read_out_b_pad"])
    # prediction[:, ::2, 0][:, inds] with the default inds = arange(n_points)
    return pred[:, ::2, 0]


# --------------------------------- main --------------------------------------

if __name__ == "__main__":
    # Small configuration consistent with the module's forward pass.
    # (Performance conclusions only hold at E >= 128, T >= 128; this config
    # exercises correctness / compilation, not throughput.)
    n_dims, n_positions = 4, 8          # P = 8 points -> sequence length T = 16
    n_embd, n_layer, n_head = 32, 2, 2
    B = 2

    key = jax.random.PRNGKey(0)
    kx, ky, kp = jax.random.split(key, 3)
    xs = jax.random.normal(kx, (B, n_positions, n_dims), dtype=jnp.float32)
    ys = jax.random.normal(ky, (B, n_positions), dtype=jnp.float32)

    params = init_params(kp, n_dims, n_positions, n_embd, n_layer, n_head)

    fwd = jax.jit(functools.partial(transformer_forward, n_head=n_head))
    out = fwd(params, xs, ys)
    out = jax.block_until_ready(out)
    assert out.shape == (B, n_positions)
    assert bool(jnp.all(jnp.isfinite(out)))
    print("KERNEL_OK")
</pallas_src>

<mosaic_0001>
module attributes {stable_mosaic.version = 11 : i64} {
  func.func @_read_in_kernel(%arg0: i32, %arg1: memref<1x16x4xf32, #tpu.memory_space<vmem>>, %arg2: memref<4x32xf32, #tpu.memory_space<vmem>>, %arg3: memref<1x32xf32, #tpu.memory_space<vmem>>, %arg4: memref<16x32xf32, #tpu.memory_space<vmem>>, %arg5: memref<1x16x32xbf16, #tpu.memory_space<vmem>>) attributes {dimension_semantics = [#tpu.dimension_semantics<parallel>], iteration_bounds = array<i64: 2>, scalar_prefetch = 0 : i64, scratch_operands = 0 : i64, tpu.core_type = #tpu.core_type<tc>, window_params = [{transform_indices = @transform_0, window_bounds = array<i64: 1, 16, 4>}, {pipeline_mode = #tpu.pipeline_mode<synchronous>, transform_indices = @transform_1, window_bounds = array<i64: 4, 32>}, {pipeline_mode = #tpu.pipeline_mode<synchronous>, transform_indices = @transform_2, window_bounds = array<i64: 1, 32>}, {pipeline_mode = #tpu.pipeline_mode<synchronous>, transform_indices = @transform_3, window_bounds = array<i64: 16, 32>}, {transform_indices = @transform_4, window_bounds = array<i64: 1, 16, 32>}]} {
    %c0 = arith.constant 0 : index
    %c0_0 = arith.constant 0 : index
    %c0_1 = arith.constant 0 : index
    %0 = vector.load %arg1[%c0, %c0_0, %c0_1] : memref<1x16x4xf32, #tpu.memory_space<vmem>>, vector<1x16x4xf32>
    %1 = vector.shape_cast %0 : vector<1x16x4xf32> to vector<16x4xf32>
    %c0_2 = arith.constant 0 : index
    %c0_3 = arith.constant 0 : index
    %2 = vector.load %arg2[%c0_2, %c0_3] : memref<4x32xf32, #tpu.memory_space<vmem>>, vector<4x32xf32>
    %c0_4 = arith.constant 0 : index
    %c0_5 = arith.constant 0 : index
    %3 = vector.load %arg4[%c0_4, %c0_5] : memref<16x32xf32, #tpu.memory_space<vmem>>, vector<16x32xf32>
    %c0_6 = arith.constant 0 : index
    %c0_7 = arith.constant 0 : index
    %4 = vector.load %arg3[%c0_6, %c0_7] : memref<1x32xf32, #tpu.memory_space<vmem>>, vector<1x32xf32>
    %5 = vector.broadcast %4 : vector<1x32xf32> to vector<16x32xf32>
    %6 = arith.addf %3, %5 : vector<16x32xf32>
    %7 = vector.extract_strided_slice %1 {offsets = [0, 0], sizes = [16, 1], strides = [1, 1]} : vector<16x4xf32> to vector<16x1xf32>
    %8 = vector.extract_strided_slice %2 {offsets = [0, 0], sizes = [1, 32], strides = [1, 1]} : vector<4x32xf32> to vector<1x32xf32>
    %9 = vector.broadcast %7 : vector<16x1xf32> to vector<16x32xf32>
    %10 = vector.broadcast %8 : vector<1x32xf32> to vector<16x32xf32>
    %11 = arith.mulf %9, %10 : vector<16x32xf32>
    %12 = arith.addf %6, %11 : vector<16x32xf32>
    %13 = vector.extract_strided_slice %1 {offsets = [0, 1], sizes = [16, 1], strides = [1, 1]} : vector<16x4xf32> to vector<16x1xf32>
    %14 = vector.extract_strided_slice %2 {offsets = [1, 0], sizes = [1, 32], strides = [1, 1]} : vector<4x32xf32> to vector<1x32xf32>
    %15 = vector.broadcast %13 : vector<16x1xf32> to vector<16x32xf32>
    %16 = vector.broadcast %14 : vector<1x32xf32> to vector<16x32xf32>
    %17 = arith.mulf %15, %16 : vector<16x32xf32>
    %18 = arith.addf %12, %17 : vector<16x32xf32>
    %19 = vector.extract_strided_slice %1 {offsets = [0, 2], sizes = [16, 1], strides = [1, 1]} : vector<16x4xf32> to vector<16x1xf32>
    %20 = vector.extract_strided_slice %2 {offsets = [2, 0], sizes = [1, 32], strides = [1, 1]} : vector<4x32xf32> to vector<1x32xf32>
    %21 = vector.broadcast %19 : vector<16x1xf32> to vector<16x32xf32>
    %22 = vector.broadcast %20 : vector<1x32xf32> to vector<16x32xf32>
    %23 = arith.mulf %21, %22 : vector<16x32xf32>
    %24 = arith.addf %18, %23 : vector<16x32xf32>
    %25 = vector.extract_strided_slice %1 {offsets = [0, 3], sizes = [16, 1], strides = [1, 1]} : vector<16x4xf32> to vector<16x1xf32>
    %26 = vector.extract_strided_slice %2 {offsets = [3, 0], sizes = [1, 32], strides = [1, 1]} : vector<4x32xf32> to vector<1x32xf32>
    %27 = vector.broadcast %25 : vector<16x1xf32> to vector<16x32xf32>
    %28 = vector.broadcast %26 : vector<1x32xf32> to vector<16x32xf32>
    %29 = arith.mulf %27, %28 : vector<16x32xf32>
    %30 = arith.addf %24, %29 : vector<16x32xf32>
    %31 = arith.truncf %30 : vector<16x32xf32> to vector<16x32xbf16>
    %c0_8 = arith.constant 0 : index
    %c0_9 = arith.constant 0 : index
    %c0_10 = arith.constant 0 : index
    %32 = vector.load %arg5[%c0_8, %c0_9, %c0_10] : memref<1x16x32xbf16, #tpu.memory_space<vmem>>, vector<1x16x32xbf16>
    %33 = vector.shape_cast %32 : vector<1x16x32xbf16> to vector<16x32xbf16>
    %34 = vector.shape_cast %31 : vector<16x32xbf16> to vector<1x16x32xbf16>
    tpu.vector_store %arg5[%c0_8, %c0_9, %c0_10], %34 {strides = array<i32>} : memref<1x16x32xbf16, #tpu.memory_space<vmem>>, vector<1x16x32xbf16>,
    return
  }
  func.func @transform_0(%arg0: i32) -> (i32, i32, i32) {
    %c0_i32 = arith.constant 0 : i32
    %c0_i32_0 = arith.constant 0 : i32
    %c0_i32_1 = arith.constant 0 : i32
    return %arg0, %c0_i32, %c0_i32_0 : i32, i32, i32
  }
  func.func @transform_1(%arg0: i32) -> (i32, i32) {
    %c0_i32 = arith.constant 0 : i32
    %c0_i32_0 = arith.constant 0 : i32
    %c0_i32_1 = arith.constant 0 : i32
    return %c0_i32, %c0_i32_0 : i32, i32
  }
  func.func @transform_2(%arg0: i32) -> (i32, i32) {
    %c0_i32 = arith.constant 0 : i32
    %c0_i32_0 = arith.constant 0 : i32
    %c0_i32_1 = arith.constant 0 : i32
    return %c0_i32, %c0_i32_0 : i32, i32
  }
  func.func @transform_3(%arg0: i32) -> (i32, i32) {
    %c0_i32 = arith.constant 0 : i32
    %c0_i32_0 = arith.constant 0 : i32
    %c0_i32_1 = arith.constant 0 : i32
    return %c0_i32, %c0_i32_0 : i32, i32
  }
  func.func @transform_4(%arg0: i32) -> (i32, i32, i32) {
    %c0_i32 = arith.constant 0 : i32
    %c0_i32_0 = arith.constant 0 : i32
    %c0_i32_1 = arith.constant 0 : i32
    return %arg0, %c0_i32, %c0_i32_0 : i32, i32, i32
  }
}

module attributes {stable_mosaic.version = 11 : i64} {
  func.func @_mlp_block_kernel(%arg0: i32, %arg1: memref<1x16x32xbf16, #tpu.memory_space<vmem>>, %arg2: memref<1x32xf32, #tpu.memory_space<vmem>>, %arg3: memref<1x32xf32, #tpu.memory_space<vmem>>, %arg4: memref<32x128xbf16, #tpu.memory_space<vmem>>, %arg5: memref<1x128xf32, #tpu.memory_space<vmem>>, %arg6: memref<128x32xbf16, #tpu.memory_space<vmem>>, %arg7: memref<1x32xf32, #tpu.memory_space<vmem>>, %arg8: memref<1x16x32xbf16, #tpu.memory_space<vmem>>) attributes {dimension_semantics = [#tpu.dimension_semantics<parallel>], iteration_bounds = array<i64: 2>, scalar_prefetch = 0 : i64, scratch_operands = 0 : i64, tpu.core_type = #tpu.core_type<tc>, window_params = [{transform_indices = @transform_0, window_bounds = array<i64: 1, 16, 32>}, {pipeline_mode = #tpu.pipeline_mode<synchronous>, transform_indices = @transform_1, window_bounds = array<i64: 1, 32>}, {pipeline_mode = #tpu.pipeline_mode<synchronous>, transform_indices = @transform_2, window_bounds = array<i64: 1, 32>}, {pipeline_mode = #tpu.pipeline_mode<synchronous>, transform_indices = @transform_3, window_bounds = array<i64: 32, 128>}, {pipeline_mode = #tpu.pipeline_mode<synchronous>, transform_indices = @transform_4, window_bounds = array<i64: 1, 128>}, {pipeline_mode = #tpu.pipeline_mode<synchronous>, transform_indices = @transform_5, window_bounds = array<i64: 128, 32>}, {pipeline_mode = #tpu.pipeline_mode<synchronous>, transform_indices = @transform_6, window_bounds = array<i64: 1, 32>}, {transform_indices = @transform_7, window_bounds = array<i64: 1, 16, 32>}]} {
    %c0 = arith.constant 0 : index
    %c0_0 = arith.constant 0 : index
    %c0_1 = arith.constant 0 : index
    %0 = vector.load %arg1[%c0, %c0_0, %c0_1] : memref<1x16x32xbf16, #tpu.memory_space<vmem>>, vector<1x16x32xbf16>
    %1 = vector.shape_cast %0 : vector<1x16x32xbf16> to vector<16x32xbf16>
    %2 = arith.extf %1 : vector<16x32xbf16> to vector<16x32xf32>
    %c0_2 = arith.constant 0 : index
    %c0_3 = arith.constant 0 : index
    %3 = vector.load %arg2[%c0_2, %c0_3] : memref<1x32xf32, #tpu.memory_space<vmem>>, vector<1x32xf32>
    %c0_4 = arith.constant 0 : index
    %c0_5 = arith.constant 0 : index
    %4 = vector.load %arg3[%c0_4, %c0_5] : memref<1x32xf32, #tpu.memory_space<vmem>>, vector<1x32xf32>
    %cst = arith.constant dense<0.000000e+00> : vector<16xf32>
    %5 = vector.multi_reduction <add>, %2, %cst [1] : vector<16x32xf32> to vector<16xf32>
    %6 = vector.shape_cast %5 : vector<16xf32> to vector<16x1xf32>
    %cst_6 = arith.constant 3.200000e+01 : f32
    %7 = vector.broadcast %cst_6 : f32 to vector<16x1xf32>
    %8 = arith.divf %6, %7 : vector<16x1xf32>
    %9 = vector.broadcast %8 : vector<16x1xf32> to vector<16x32xf32>
    %10 = arith.subf %2, %9 : vector<16x32xf32>
    %11 = arith.mulf %10, %10 : vector<16x32xf32>
    %cst_7 = arith.constant dense<0.000000e+00> : vector<16xf32>
    %12 = vector.multi_reduction <add>, %11, %cst_7 [1] : vector<16x32xf32> to vector<16xf32>
    %13 = vector.shape_cast %12 : vector<16xf32> to vector<16x1xf32>
    %cst_8 = arith.constant 3.200000e+01 : f32
    %14 = vector.broadcast %cst_8 : f32 to vector<16x1xf32>
    %15 = arith.divf %13, %14 : vector<16x1xf32>
    %16 = vector.broadcast %8 : vector<16x1xf32> to vector<16x32xf32>
    %17 = arith.subf %2, %16 : vector<16x32xf32>
    %cst_9 = arith.constant 9.99999974E-6 : f32
    %18 = vector.broadcast %cst_9 : f32 to vector<16x1xf32>
    %19 = arith.addf %15, %18 : vector<16x1xf32>
    %20 = math.rsqrt %19 : vector<16x1xf32>
    %21 = vector.broadcast %20 : vector<16x1xf32> to vector<16x32xf32>
    %22 = arith.mulf %17, %21 : vector<16x32xf32>
    %23 = vector.broadcast %3 : vector<1x32xf32> to vector<16x32xf32>
    %24 = arith.mulf %22, %23 : vector<16x32xf32>
    %25 = vector.broadcast %4 : vector<1x32xf32> to vector<16x32xf32>
    %26 = arith.addf %24, %25 : vector<16x32xf32>
    %27 = arith.truncf %26 : vector<16x32xf32> to vector<16x32xbf16>
    %c0_10 = arith.constant 0 : index
    %c0_11 = arith.constant 0 : index
    %28 = vector.load %arg4[%c0_10, %c0_11] : memref<32x128xbf16, #tpu.memory_space<vmem>>, vector<32x128xbf16>
    %cst_12 = arith.constant dense<0.000000e+00> : vector<16x128xf32>
    %29 = tpu.matmul %27, %28, %cst_12 {dimension_numbers = #tpu.dot_dimension_numbers<[1], [0], [0], [1], [0, 0, 1, 1], [], []>} : vector<16x32xbf16>, vector<32x128xbf16>, vector<16x128xf32> -> vector<16x128xf32>
    %c0_13 = arith.constant 0 : index
    %c0_14 = arith.constant 0 : index
    %30 = vector.load %arg5[%c0_13, %c0_14] : memref<1x128xf32, #tpu.memory_space<vmem>>, vector<1x128xf32>
    %31 = vector.broadcast %30 : vector<1x128xf32> to vector<16x128xf32>
    %32 = arith.addf %29, %31 : vector<16x128xf32>
    %cst_15 = arith.constant 5.000000e-01 : f32
    %33 = vector.broadcast %cst_15 : f32 to vector<16x128xf32>
    %34 = arith.mulf %33, %32 : vector<16x128xf32>
    %cst_16 = arith.constant 4.471500e-02 : f32
    %35 = vector.broadcast %cst_16 : f32 to vector<16x128xf32>
    %36 = arith.mulf %35, %32 : vector<16x128xf32>
    %37 = arith.mulf %36, %32 : vector<16x128xf32>
    %38 = arith.mulf %37, %32 : vector<16x128xf32>
    %39 = arith.addf %32, %38 : vector<16x128xf32>
    %cst_17 = arith.constant 0.797884583 : f32
    %40 = vector.broadcast %cst_17 : f32 to vector<16x128xf32>
    %41 = arith.mulf %40, %39 : vector<16x128xf32>
    %42 = math.tanh %41 : vector<16x128xf32>
    %cst_18 = arith.constant 1.000000e+00 : f32
    %43 = vector.broadcast %cst_18 : f32 to vector<16x128xf32>
    %44 = arith.addf %43, %42 : vector<16x128xf32>
    %45 = arith.mulf %34, %44 : vector<16x128xf32>
    %46 = arith.truncf %45 : vector<16x128xf32> to vector<16x128xbf16>
    %c0_19 = arith.constant 0 : index
    %c0_20 = arith.constant 0 : index
    %47 = vector.load %arg6[%c0_19, %c0_20] : memref<128x32xbf16, #tpu.memory_space<vmem>>, vector<128x32xbf16>
    %cst_21 = arith.constant dense<0.000000e+00> : vector<16x32xf32>
    %48 = tpu.matmul %46, %47, %cst_21 {dimension_numbers = #tpu.dot_dimension_numbers<[1], [0], [0], [1], [0, 0, 1, 1], [], []>} : vector<16x128xbf16>, vector<128x32xbf16>, vector<16x32xf32> -> vector<16x32xf32>
    %c0_22 = arith.constant 0 : index
    %c0_23 = arith.constant 0 : index
    %49 = vector.load %arg7[%c0_22, %c0_23] : memref<1x32xf32, #tpu.memory_space<vmem>>, vector<1x32xf32>
    %50 = vector.broadcast %49 : vector<1x32xf32> to vector<16x32xf32>
    %51 = arith.addf %48, %50 : vector<16x32xf32>
    %52 = arith.addf %51, %2 : vector<16x32xf32>
    %53 = arith.truncf %52 : vector<16x32xf32> to vector<16x32xbf16>
    %c0_24 = arith.constant 0 : index
    %c0_25 = arith.constant 0 : index
    %c0_26 = arith.constant 0 : index
    %54 = vector.load %arg8[%c0_24, %c0_25, %c0_26] : memref<1x16x32xbf16, #tpu.memory_space<vmem>>, vector<1x16x32xbf16>
    %55 = vector.shape_cast %54 : vector<1x16x32xbf16> to vector<16x32xbf16>
    %56 = vector.shape_cast %53 : vector<16x32xbf16> to vector<1x16x32xbf16>
    tpu.vector_store %arg8[%c0_24, %c0_25, %c0_26], %56 {strides = array<i32>} : memref<1x16x32xbf16, #tpu.memory_space<vmem>>, vector<1x16x32xbf16>,
    return
  }
  func.func @transform_0(%arg0: i32) -> (i32, i32, i32) {
    %c0_i32 = arith.constant 0 : i32
    %c0_i32_0 = arith.constant 0 : i32
    %c0_i32_1 = arith.constant 0 : i32
    return %arg0, %c0_i32, %c0_i32_0 : i32, i32, i32
  }
  func.func @transform_1(%arg0: i32) -> (i32, i32) {
    %c0_i32 = arith.constant 0 : i32
    %c0_i32_0 = arith.constant 0 : i32
    %c0_i32_1 = arith.constant 0 : i32
    return %c0_i32, %c0_i32_0 : i32, i32
  }
  func.func @transform_2(%arg0: i32) -> (i32, i32) {
    %c0_i32 = arith.constant 0 : i32
    %c0_i32_0 = arith.constant 0 : i32
    %c0_i32_1 = arith.constant 0 : i32
    return %c0_i32, %c0_i32_0 : i32, i32
  }
  func.func @transform_3(%arg0: i32) -> (i32, i32) {
    %c0_i32 = arith.constant 0 : i32
    %c0_i32_0 = arith.constant 0 : i32
    %c0_i32_1 = arith.constant 0 : i32
    return %c0_i32, %c0_i32_0 : i32, i32
  }
  func.func @transform_4(%arg0: i32) -> (i32, i32) {
    %c0_i32 = arith.constant 0 : i32
    %c0_i32_0 = arith.constant 0 : i32
    %c0_i32_1 = arith.constant 0 : i32
    return %c0_i32, %c0_i32_0 : i32, i32
  }
  func.func @transform_5(%arg0: i32) -> (i32, i32) {
    %c0_i32 = arith.constant 0 : i32
    %c0_i32_0 = arith.constant 0 : i32
    %c0_i32_1 = arith.constant 0 : i32
    return %c0_i32, %c0_i32_0 : i32, i32
  }
  func.func @transform_6(%arg0: i32) -> (i32, i32) {
    %c0_i32 = arith.constant 0 : i32
    %c0_i32_0 = arith.constant 0 : i32
    %c0_i32_1 = arith.constant 0 : i32
    return %c0_i32, %c0_i32_0 : i32, i32
  }
  func.func @transform_7(%arg0: i32) -> (i32, i32, i32) {
    %c0_i32 = arith.constant 0 : i32
    %c0_i32_0 = arith.constant 0 : i32
    %c0_i32_1 = arith.constant 0 : i32
    return %arg0, %c0_i32, %c0_i32_0 : i32, i32, i32
  }
}

module attributes {stable_mosaic.version = 11 : i64} {
  func.func @_attn_block_kernel(%arg0: i32, %arg1: memref<1x16x32xbf16, #tpu.memory_space<vmem>>, %arg2: memref<1x32xf32, #tpu.memory_space<vmem>>, %arg3: memref<1x32xf32, #tpu.memory_space<vmem>>, %arg4: memref<32x96xbf16, #tpu.memory_space<vmem>>, %arg5: memref<1x96xf32, #tpu.memory_space<vmem>>, %arg6: memref<32x32xbf16, #tpu.memory_space<vmem>>, %arg7: memref<1x32xf32, #tpu.memory_space<vmem>>, %arg8: memref<1x16x32xbf16, #tpu.memory_space<vmem>>) attributes {dimension_semantics = [#tpu.dimension_semantics<parallel>], iteration_bounds = array<i64: 2>, scalar_prefetch = 0 : i64, scratch_operands = 0 : i64, tpu.core_type = #tpu.core_type<tc>, window_params = [{transform_indices = @transform_0, window_bounds = array<i64: 1, 16, 32>}, {pipeline_mode = #tpu.pipeline_mode<synchronous>, transform_indices = @transform_1, window_bounds = array<i64: 1, 32>}, {pipeline_mode = #tpu.pipeline_mode<synchronous>, transform_indices = @transform_2, window_bounds = array<i64: 1, 32>}, {pipeline_mode = #tpu.pipeline_mode<synchronous>, transform_indices = @transform_3, window_bounds = array<i64: 32, 96>}, {pipeline_mode = #tpu.pipeline_mode<synchronous>, transform_indices = @transform_4, window_bounds = array<i64: 1, 96>}, {pipeline_mode = #tpu.pipeline_mode<synchronous>, transform_indices = @transform_5, window_bounds = array<i64: 32, 32>}, {pipeline_mode = #tpu.pipeline_mode<synchronous>, transform_indices = @transform_6, window_bounds = array<i64: 1, 32>}, {transform_indices = @transform_7, window_bounds = array<i64: 1, 16, 32>}]} {
    %c0 = arith.constant 0 : index
    %c0_0 = arith.constant 0 : index
    %c0_1 = arith.constant 0 : index
    %0 = vector.load %arg1[%c0, %c0_0, %c0_1] : memref<1x16x32xbf16, #tpu.memory_space<vmem>>, vector<1x16x32xbf16>
    %1 = vector.shape_cast %0 : vector<1x16x32xbf16> to vector<16x32xbf16>
    %2 = arith.extf %1 : vector<16x32xbf16> to vector<16x32xf32>
    %c0_2 = arith.constant 0 : index
    %c0_3 = arith.constant 0 : index
    %3 = vector.load %arg2[%c0_2, %c0_3] : memref<1x32xf32, #tpu.memory_space<vmem>>, vector<1x32xf32>
    %c0_4 = arith.constant 0 : index
    %c0_5 = arith.constant 0 : index
    %4 = vector.load %arg3[%c0_4, %c0_5] : memref<1x32xf32, #tpu.memory_space<vmem>>, vector<1x32xf32>
    %cst = arith.constant dense<0.000000e+00> : vector<16xf32>
    %5 = vector.multi_reduction <add>, %2, %cst [1] : vector<16x32xf32> to vector<16xf32>
    %6 = vector.shape_cast %5 : vector<16xf32> to vector<16x1xf32>
    %cst_6 = arith.constant 3.200000e+01 : f32
    %7 = vector.broadcast %cst_6 : f32 to vector<16x1xf32>
    %8 = arith.divf %6, %7 : vector<16x1xf32>
    %9 = vector.broadcast %8 : vector<16x1xf32> to vector<16x32xf32>
    %10 = arith.subf %2, %9 : vector<16x32xf32>
    %11 = arith.mulf %10, %10 : vector<16x32xf32>
    %cst_7 = arith.constant dense<0.000000e+00> : vector<16xf32>
    %12 = vector.multi_reduction <add>, %11, %cst_7 [1] : vector<16x32xf32> to vector<16xf32>
    %13 = vector.shape_cast %12 : vector<16xf32> to vector<16x1xf32>
    %cst_8 = arith.constant 3.200000e+01 : f32
    %14 = vector.broadcast %cst_8 : f32 to vector<16x1xf32>
    %15 = arith.divf %13, %14 : vector<16x1xf32>
    %16 = vector.broadcast %8 : vector<16x1xf32> to vector<16x32xf32>
    %17 = arith.subf %2, %16 : vector<16x32xf32>
    %cst_9 = arith.constant 9.99999974E-6 : f32
    %18 = vector.broadcast %cst_9 : f32 to vector<16x1xf32>
    %19 = arith.addf %15, %18 : vector<16x1xf32>
    %20 = math.rsqrt %19 : vector<16x1xf32>
    %21 = vector.broadcast %20 : vector<16x1xf32> to vector<16x32xf32>
    %22 = arith.mulf %17, %21 : vector<16x32xf32>
    %23 = vector.broadcast %3 : vector<1x32xf32> to vector<16x32xf32>
    %24 = arith.mulf %22, %23 : vector<16x32xf32>
    %25 = vector.broadcast %4 : vector<1x32xf32> to vector<16x32xf32>
    %26 = arith.addf %24, %25 : vector<16x32xf32>
    %27 = arith.truncf %26 : vector<16x32xf32> to vector<16x32xbf16>
    %c0_10 = arith.constant 0 : index
    %c0_11 = arith.constant 0 : index
    %28 = vector.load %arg4[%c0_10, %c0_11] : memref<32x96xbf16, #tpu.memory_space<vmem>>, vector<32x96xbf16>
    %cst_12 = arith.constant dense<0.000000e+00> : vector<16x96xf32>
    %29 = tpu.matmul %27, %28, %cst_12 {dimension_numbers = #tpu.dot_dimension_numbers<[1], [0], [0], [1], [0, 0, 1, 1], [], []>} : vector<16x32xbf16>, vector<32x96xbf16>, vector<16x96xf32> -> vector<16x96xf32>
    %c0_13 = arith.constant 0 : index
    %c0_14 = arith.constant 0 : index
    %30 = vector.load %arg5[%c0_13, %c0_14] : memref<1x96xf32, #tpu.memory_space<vmem>>, vector<1x96xf32>
    %31 = vector.broadcast %30 : vector<1x96xf32> to vector<16x96xf32>
    %32 = arith.addf %29, %31 : vector<16x96xf32>
    %33 = arith.truncf %32 : vector<16x96xf32> to vector<16x96xbf16>
    %34 = tpu.iota {dimensions = array<i32: 0>} : vector<16x16xi32>
    %35 = tpu.iota {dimensions = array<i32: 1>} : vector<16x16xi32>
    %36 = arith.cmpi sle, %35, %34 : vector<16x16xi32>
    %37 = vector.extract_strided_slice %33 {offsets = [0, 0], sizes = [16, 16], strides = [1, 1]} : vector<16x96xbf16> to vector<16x16xbf16>
    %38 = vector.extract_strided_slice %33 {offsets = [0, 32], sizes = [16, 16], strides = [1, 1]} : vector<16x96xbf16> to vector<16x16xbf16>
    %39 = vector.extract_strided_slice %33 {offsets = [0, 64], sizes = [16, 16], strides = [1, 1]} : vector<16x96xbf16> to vector<16x16xbf16>
    %cst_15 = arith.constant dense<0.000000e+00> : vector<16x16xf32>
    %40 = tpu.matmul %37, %38, %cst_15 {dimension_numbers = #tpu.dot_dimension_numbers<[1], [1], [0], [0], [0, 0, 1, 0], [], []>} : vector<16x16xbf16>, vector<16x16xbf16>, vector<16x16xf32> -> vector<16x16xf32>
    %cst_16 = arith.constant 2.500000e-01 : f32
    %41 = vector.broadcast %cst_16 : f32 to vector<16x16xf32>
    %42 = arith.mulf %40, %41 : vector<16x16xf32>
    %cst_17 = arith.constant -1.000000e+30 : f32
    %43 = vector.broadcast %cst_17 : f32 to vector<16x16xf32>
    %44 = arith.select %36, %42, %43 : vector<16x16xi1>, vector<16x16xf32>
    %cst_18 = arith.constant dense<0xFF800000> : vector<16xf32>
    %45 = vector.multi_reduction <maximumf>, %44, %cst_18 [1] : vector<16x16xf32> to vector<16xf32>
    %46 = vector.shape_cast %45 : vector<16xf32> to vector<16x1xf32>
    %47 = vector.broadcast %46 : vector<16x1xf32> to vector<16x16xf32>
    %48 = arith.subf %44, %47 : vector<16x16xf32>
    %49 = math.exp %48 : vector<16x16xf32>
    %cst_19 = arith.constant dense<0.000000e+00> : vector<16xf32>
    %50 = vector.multi_reduction <add>, %49, %cst_19 [1] : vector<16x16xf32> to vector<16xf32>
    %51 = vector.shape_cast %50 : vector<16xf32> to vector<16x1xf32>
    %52 = vector.broadcast %51 : vector<16x1xf32> to vector<16x16xf32>
    %53 = arith.divf %49, %52 : vector<16x16xf32>
    %54 = arith.truncf %53 : vector<16x16xf32> to vector<16x16xbf16>
    %cst_20 = arith.constant dense<0.000000e+00> : vector<16x16xf32>
    %55 = tpu.matmul %54, %39, %cst_20 {dimension_numbers = #tpu.dot_dimension_numbers<[1], [0], [0], [1], [0, 0, 1, 1], [], []>} : vector<16x16xbf16>, vector<16x16xbf16>, vector<16x16xf32> -> vector<16x16xf32>
    %56 = vector.extract_strided_slice %33 {offsets = [0, 16], sizes = [16, 16], strides = [1, 1]} : vector<16x96xbf16> to vector<16x16xbf16>
    %57 = vector.extract_strided_slice %33 {offsets = [0, 48], sizes = [16, 16], strides = [1, 1]} : vector<16x96xbf16> to vector<16x16xbf16>
    %58 = vector.extract_strided_slice %33 {offsets = [0, 80], sizes = [16, 16], strides = [1, 1]} : vector<16x96xbf16> to vector<16x16xbf16>
    %cst_21 = arith.constant dense<0.000000e+00> : vector<16x16xf32>
    %59 = tpu.matmul %56, %57, %cst_21 {dimension_numbers = #tpu.dot_dimension_numbers<[1], [1], [0], [0], [0, 0, 1, 0], [], []>} : vector<16x16xbf16>, vector<16x16xbf16>, vector<16x16xf32> -> vector<16x16xf32>
    %cst_22 = arith.constant 2.500000e-01 : f32
    %60 = vector.broadcast %cst_22 : f32 to vector<16x16xf32>
    %61 = arith.mulf %59, %60 : vector<16x16xf32>
    %cst_23 = arith.constant -1.000000e+30 : f32
    %62 = vector.broadcast %cst_23 : f32 to vector<16x16xf32>
    %63 = arith.select %36, %61, %62 : vector<16x16xi1>, vector<16x16xf32>
    %cst_24 = arith.constant dense<0xFF800000> : vector<16xf32>
    %64 = vector.multi_reduction <maximumf>, %63, %cst_24 [1] : vector<16x16xf32> to vector<16xf32>
    %65 = vector.shape_cast %64 : vector<16xf32> to vector<16x1xf32>
    %66 = vector.broadcast %65 : vector<16x1xf32> to vector<16x16xf32>
    %67 = arith.subf %63, %66 : vector<16x16xf32>
    %68 = math.exp %67 : vector<16x16xf32>
    %cst_25 = arith.constant dense<0.000000e+00> : vector<16xf32>
    %69 = vector.multi_reduction <add>, %68, %cst_25 [1] : vector<16x16xf32> to vector<16xf32>
    %70 = vector.shape_cast %69 : vector<16xf32> to vector<16x1xf32>
    %71 = vector.broadcast %70 : vector<16x1xf32> to vector<16x16xf32>
    %72 = arith.divf %68, %71 : vector<16x16xf32>
    %73 = arith.truncf %72 : vector<16x16xf32> to vector<16x16xbf16>
    %cst_26 = arith.constant dense<0.000000e+00> : vector<16x16xf32>
    %74 = tpu.matmul %73, %58, %cst_26 {dimension_numbers = #tpu.dot_dimension_numbers<[1], [0], [0], [1], [0, 0, 1, 1], [], []>} : vector<16x16xbf16>, vector<16x16xbf16>, vector<16x16xf32> -> vector<16x16xf32>
    %75 = tpu.concatenate %55, %74 in 1 : vector<16x16xf32>, vector<16x16xf32> -> vector<16x32xf32>
    %76 = arith.truncf %75 : vector<16x32xf32> to vector<16x32xbf16>
    %c0_27 = arith.constant 0 : index
    %c0_28 = arith.constant 0 : index
    %77 = vector.load %arg6[%c0_27, %c0_28] : memref<32x32xbf16, #tpu.memory_space<vmem>>, vector<32x32xbf16>
    %cst_29 = arith.constant dense<0.000000e+00> : vector<16x32xf32>
    %78 = tpu.matmul %76, %77, %cst_29 {dimension_numbers = #tpu.dot_dimension_numbers<[1], [0], [0], [1], [0, 0, 1, 1], [], []>} : vector<16x32xbf16>, vector<32x32xbf16>, vector<16x32xf32> -> vector<16x32xf32>
    %c0_30 = arith.constant 0 : index
    %c0_31 = arith.constant 0 : index
    %79 = vector.load %arg7[%c0_30, %c0_31] : memref<1x32xf32, #tpu.memory_space<vmem>>, vector<1x32xf32>
    %80 = vector.broadcast %79 : vector<1x32xf32> to vector<16x32xf32>
    %81 = arith.addf %78, %80 : vector<16x32xf32>
    %82 = arith.addf %81, %2 : vector<16x32xf32>
    %83 = arith.truncf %82 : vector<16x32xf32> to vector<16x32xbf16>
    %c0_32 = arith.constant 0 : index
    %c0_33 = arith.constant 0 : index
    %c0_34 = arith.constant 0 : index
    %84 = vector.load %arg8[%c0_32, %c0_33, %c0_34] : memref<1x16x32xbf16, #tpu.memory_space<vmem>>, vector<1x16x32xbf16>
    %85 = vector.shape_cast %84 : vector<1x16x32xbf16> to vector<16x32xbf16>
    %86 = vector.shape_cast %83 : vector<16x32xbf16> to vector<1x16x32xbf16>
    tpu.vector_store %arg8[%c0_32, %c0_33, %c0_34], %86 {strides = array<i32>} : memref<1x16x32xbf16, #tpu.memory_space<vmem>>, vector<1x16x32xbf16>,
    return
  }
  func.func @transform_0(%arg0: i32) -> (i32, i32, i32) {
    %c0_i32 = arith.constant 0 : i32
    %c0_i32_0 = arith.constant 0 : i32
    %c0_i32_1 = arith.constant 0 : i32
    return %arg0, %c0_i32, %c0_i32_0 : i32, i32, i32
  }
  func.func @transform_1(%arg0: i32) -> (i32, i32) {
    %c0_i32 = arith.constant 0 : i32
    %c0_i32_0 = arith.constant 0 : i32
    %c0_i32_1 = arith.constant 0 : i32
    return %c0_i32, %c0_i32_0 : i32, i32
  }
  func.func @transform_2(%arg0: i32) -> (i32, i32) {
    %c0_i32 = arith.constant 0 : i32
    %c0_i32_0 = arith.constant 0 : i32
    %c0_i32_1 = arith.constant 0 : i32
    return %c0_i32, %c0_i32_0 : i32, i32
  }
  func.func @transform_3(%arg0: i32) -> (i32, i32) {
    %c0_i32 = arith.constant 0 : i32
    %c0_i32_0 = arith.constant 0 : i32
    %c0_i32_1 = arith.constant 0 : i32
    return %c0_i32, %c0_i32_0 : i32, i32
  }
  func.func @transform_4(%arg0: i32) -> (i32, i32) {
    %c0_i32 = arith.constant 0 : i32
    %c0_i32_0 = arith.constant 0 : i32
    %c0_i32_1 = arith.constant 0 : i32
    return %c0_i32, %c0_i32_0 : i32, i32
  }
  func.func @transform_5(%arg0: i32) -> (i32, i32) {
    %c0_i32 = arith.constant 0 : i32
    %c0_i32_0 = arith.constant 0 : i32
    %c0_i32_1 = arith.constant 0 : i32
    return %c0_i32, %c0_i32_0 : i32, i32
  }
  func.func @transform_6(%arg0: i32) -> (i32, i32) {
    %c0_i32 = arith.constant 0 : i32
    %c0_i32_0 = arith.constant 0 : i32
    %c0_i32_1 = arith.constant 0 : i32
    return %c0_i32, %c0_i32_0 : i32, i32
  }
  func.func @transform_7(%arg0: i32) -> (i32, i32, i32) {
    %c0_i32 = arith.constant 0 : i32
    %c0_i32_0 = arith.constant 0 : i32
    %c0_i32_1 = arith.constant 0 : i32
    return %arg0, %c0_i32, %c0_i32_0 : i32, i32, i32
  }
}

module attributes {stable_mosaic.version = 11 : i64} {
  func.func @_read_out_kernel(%arg0: i32, %arg1: memref<1x16x32xbf16, #tpu.memory_space<vmem>>, %arg2: memref<1x32xf32, #tpu.memory_space<vmem>>, %arg3: memref<1x32xf32, #tpu.memory_space<vmem>>, %arg4: memref<32x128xbf16, #tpu.memory_space<vmem>>, %arg5: memref<1x128xf32, #tpu.memory_space<vmem>>, %arg6: memref<1x16x128xf32, #tpu.memory_space<vmem>>) attributes {dimension_semantics = [#tpu.dimension_semantics<parallel>], iteration_bounds = array<i64: 2>, scalar_prefetch = 0 : i64, scratch_operands = 0 : i64, tpu.core_type = #tpu.core_type<tc>, window_params = [{transform_indices = @transform_0, window_bounds = array<i64: 1, 16, 32>}, {pipeline_mode = #tpu.pipeline_mode<synchronous>, transform_indices = @transform_1, window_bounds = array<i64: 1, 32>}, {pipeline_mode = #tpu.pipeline_mode<synchronous>, transform_indices = @transform_2, window_bounds = array<i64: 1, 32>}, {pipeline_mode = #tpu.pipeline_mode<synchronous>, transform_indices = @transform_3, window_bounds = array<i64: 32, 128>}, {pipeline_mode = #tpu.pipeline_mode<synchronous>, transform_indices = @transform_4, window_bounds = array<i64: 1, 128>}, {transform_indices = @transform_5, window_bounds = array<i64: 1, 16, 128>}]} {
    %c0 = arith.constant 0 : index
    %c0_0 = arith.constant 0 : index
    %c0_1 = arith.constant 0 : index
    %0 = vector.load %arg1[%c0, %c0_0, %c0_1] : memref<1x16x32xbf16, #tpu.memory_space<vmem>>, vector<1x16x32xbf16>
    %1 = vector.shape_cast %0 : vector<1x16x32xbf16> to vector<16x32xbf16>
    %2 = arith.extf %1 : vector<16x32xbf16> to vector<16x32xf32>
    %c0_2 = arith.constant 0 : index
    %c0_3 = arith.constant 0 : index
    %3 = vector.load %arg2[%c0_2, %c0_3] : memref<1x32xf32, #tpu.memory_space<vmem>>, vector<1x32xf32>
    %c0_4 = arith.constant 0 : index
    %c0_5 = arith.constant 0 : index
    %4 = vector.load %arg3[%c0_4, %c0_5] : memref<1x32xf32, #tpu.memory_space<vmem>>, vector<1x32xf32>
    %cst = arith.constant dense<0.000000e+00> : vector<16xf32>
    %5 = vector.multi_reduction <add>, %2, %cst [1] : vector<16x32xf32> to vector<16xf32>
    %6 = vector.shape_cast %5 : vector<16xf32> to vector<16x1xf32>
    %cst_6 = arith.constant 3.200000e+01 : f32
    %7 = vector.broadcast %cst_6 : f32 to vector<16x1xf32>
    %8 = arith.divf %6, %7 : vector<16x1xf32>
    %9 = vector.broadcast %8 : vector<16x1xf32> to vector<16x32xf32>
    %10 = arith.subf %2, %9 : vector<16x32xf32>
    %11 = arith.mulf %10, %10 : vector<16x32xf32>
    %cst_7 = arith.constant dense<0.000000e+00> : vector<16xf32>
    %12 = vector.multi_reduction <add>, %11, %cst_7 [1] : vector<16x32xf32> to vector<16xf32>
    %13 = vector.shape_cast %12 : vector<16xf32> to vector<16x1xf32>
    %cst_8 = arith.constant 3.200000e+01 : f32
    %14 = vector.broadcast %cst_8 : f32 to vector<16x1xf32>
    %15 = arith.divf %13, %14 : vector<16x1xf32>
    %16 = vector.broadcast %8 : vector<16x1xf32> to vector<16x32xf32>
    %17 = arith.subf %2, %16 : vector<16x32xf32>
    %cst_9 = arith.constant 9.99999974E-6 : f32
    %18 = vector.broadcast %cst_9 : f32 to vector<16x1xf32>
    %19 = arith.addf %15, %18 : vector<16x1xf32>
    %20 = math.rsqrt %19 : vector<16x1xf32>
    %21 = vector.broadcast %20 : vector<16x1xf32> to vector<16x32xf32>
    %22 = arith.mulf %17, %21 : vector<16x32xf32>
    %23 = vector.broadcast %3 : vector<1x32xf32> to vector<16x32xf32>
    %24 = arith.mulf %22, %23 : vector<16x32xf32>
    %25 = vector.broadcast %4 : vector<1x32xf32> to vector<16x32xf32>
    %26 = arith.addf %24, %25 : vector<16x32xf32>
    %27 = arith.truncf %26 : vector<16x32xf32> to vector<16x32xbf16>
    %c0_10 = arith.constant 0 : index
    %c0_11 = arith.constant 0 : index
    %28 = vector.load %arg4[%c0_10, %c0_11] : memref<32x128xbf16, #tpu.memory_space<vmem>>, vector<32x128xbf16>
    %cst_12 = arith.constant dense<0.000000e+00> : vector<16x128xf32>
    %29 = tpu.matmul %27, %28, %cst_12 {dimension_numbers = #tpu.dot_dimension_numbers<[1], [0], [0], [1], [0, 0, 1, 1], [], []>} : vector<16x32xbf16>, vector<32x128xbf16>, vector<16x128xf32> -> vector<16x128xf32>
    %c0_13 = arith.constant 0 : index
    %c0_14 = arith.constant 0 : index
    %30 = vector.load %arg5[%c0_13, %c0_14] : memref<1x128xf32, #tpu.memory_space<vmem>>, vector<1x128xf32>
    %31 = vector.broadcast %30 : vector<1x128xf32> to vector<16x128xf32>
    %32 = arith.addf %29, %31 : vector<16x128xf32>
    %c0_15 = arith.constant 0 : index
    %c0_16 = arith.constant 0 : index
    %c0_17 = arith.constant 0 : index
    %33 = vector.load %arg6[%c0_15, %c0_16, %c0_17] : memref<1x16x128xf32, #tpu.memory_space<vmem>>, vector<1x16x128xf32>
    %34 = vector.shape_cast %33 : vector<1x16x128xf32> to vector<16x128xf32>
    %35 = vector.shape_cast %32 : vector<16x128xf32> to vector<1x16x128xf32>
    tpu.vector_store %arg6[%c0_15, %c0_16, %c0_17], %35 {strides = array<i32>} : memref<1x16x128xf32, #tpu.memory_space<vmem>>, vector<1x16x128xf32>,
    return
  }
  func.func @transform_0(%arg0: i32) -> (i32, i32, i32) {
    %c0_i32 = arith.constant 0 : i32
    %c0_i32_0 = arith.constant 0 : i32
    %c0_i32_1 = arith.constant 0 : i32
    return %arg0, %c0_i32, %c0_i32_0 : i32, i32, i32
  }
  func.func @transform_1(%arg0: i32) -> (i32, i32) {
    %c0_i32 = arith.constant 0 : i32
    %c0_i32_0 = arith.constant 0 : i32
    %c0_i32_1 = arith.constant 0 : i32
    return %c0_i32, %c0_i32_0 : i32, i32
  }
  func.func @transform_2(%arg0: i32) -> (i32, i32) {
    %c0_i32 = arith.constant 0 : i32
    %c0_i32_0 = arith.constant 0 : i32
    %c0_i32_1 = arith.constant 0 : i32
    return %c0_i32, %c0_i32_0 : i32, i32
  }
  func.func @transform_3(%arg0: i32) -> (i32, i32) {
    %c0_i32 = arith.constant 0 : i32
    %c0_i32_0 = arith.constant 0 : i32
    %c0_i32_1 = arith.constant 0 : i32
    return %c0_i32, %c0_i32_0 : i32, i32
  }
  func.func @transform_4(%arg0: i32) -> (i32, i32) {
    %c0_i32 = arith.constant 0 : i32
    %c0_i32_0 = arith.constant 0 : i32
    %c0_i32_1 = arith.constant 0 : i32
    return %c0_i32, %c0_i32_0 : i32, i32
  }
  func.func @transform_5(%arg0: i32) -> (i32, i32, i32) {
    %c0_i32 = arith.constant 0 : i32
    %c0_i32_0 = arith.constant 0 : i32
    %c0_i32_1 = arith.constant 0 : i32
    return %arg0, %c0_i32, %c0_i32_0 : i32, i32, i32
  }
}

</mosaic_0001>

<llo_original>
// kernel: transformer_forward.6
$region0: #{transformer_forward.6}
  #allocation0 [shape = 'u32[]', space=smem, size = 0x4, offset = 0x4, fixed_abs, tag = 'smem constant byte address 0x4 - core index']
  #allocation1 [shape = 'u32[144,128]{1,0:T(1,128)}', space=vmem, size = 0x12000, scoped, tag = 'internal scratch']
  %s0 = inlined_call_operand.vmem [shape: f32[2,16,4], index: 0, kind: input, shape index: {}]
  %s1 = inlined_call_operand.vmem [shape: f32[4,32], index: 1, kind: input, shape index: {}]
  %s2 = inlined_call_operand.vmem [shape: f32[1,32], index: 2, kind: input, shape index: {}]
  %s3 = inlined_call_operand.vmem [shape: f32[16,32], index: 3, kind: input, shape index: {}]
  %s4 = inlined_call_operand.vmem [shape: bf16[2,16,32], index: 4, kind: output, shape index: {}]
  %s5 = sld [smem:[#allocation0]]
  $region49: #{transformer_forward.6} parent=0
    _
  %s7 = ssub.s32 1, %s5
  %s8 = scalar_select 0, %s7, %s5
  loop: start=0, step=1, limit=4
  $region2: #{transformer_forward.6} parent=0 // loop_pre_header
    _
  $region3: #{transformer_forward.6} parent=0 // loop_header
    %s10 = sphi 0, %s14
    %p11 = scmp.ge.s32.totalorder %s10, 4
    %s20 = sphi 0, %s22
    %s23 = sphi 0, %s20
    %s24 = sphi 0, %s23
    %s40 = sphi 0, %s24
    %s44 = sphi 0, %s44
    %s46 = sphi 0, %s44
    %s47 = sphi 0, %s46
    %s61 = sphi 0, %s47
    %s65 = sphi 0, %s65
    %s67 = sphi 0, %s65
    %s68 = sphi 0, %s67
    %s82 = sphi 0, %s68
    %s86 = sphi 0, %s86
    %s88 = sphi 0, %s86
    %s89 = sphi 0, %s88
    %s103 = sphi 0, %s89
    %s109 = sphi 0, %s111
    %s112 = sphi 0, %s109
    %s113 = sphi 0, %s112
    %s129 = sphi 0, %s113
  $region4: #{transformer_forward.6} parent=0 // loop_header_branch
    %13 = sbr.rel (%p11) target = $region8
  $region5: #{transformer_forward.6} parent=0 // loop_body
    %s15 = ssub.s32 %s10, 1
    %s16 = ssub.s32 %s10, 2
    %s17 = sadd.s32 %s10, 1
    %s18 = ssub.s32 %s10, %s17
    %p19 = scmp.eq.s32.totalorder %s18, 0
    %s21 = sadd.s32 %s20, 1
    %s22 = scalar_select %p19, %s20, %s21
    %p25 = pneg %p19
    %p26 = scmp.eq.s32.totalorder %s10, 1
    %p27 = por %p25, %p26
    %p28 = scmp.ne.s32.totalorder %s20, %s23
    %p29 = scmp.eq.s32.totalorder %s10, 0
    %p30 = por %p28, %p29
    %p31 = scmp.ne.s32.totalorder %s20, %s23
    %p32 = scmp.eq.s32.totalorder %s15, 1
    %p33 = por %p31, %p32
    %p34 = scmp.ne.s32.totalorder %s23, %s24
    %p35 = scmp.eq.s32.totalorder %s15, 0
    %p36 = por %p34, %p35
    %p37 = scmp.ne.s32.totalorder %s23, %s24
    %p38 = scmp.eq.s32.totalorder %s16, 1
    %p39 = por %p37, %p38
    %p41 = scmp.ne.s32.totalorder %s24, %s40
    %p42 = scmp.eq.s32.totalorder %s16, 0
    %p43 = por %p41, %p42
    %s45 = sadd.s32 %s44, 1
    %p48 = scmp.eq.s32.totalorder %s10, 1
    %p49 = scmp.ne.s32.totalorder %s44, %s46
    %p50 = scmp.eq.s32.totalorder %s10, 0
    %p51 = por %p49, %p50
    %p52 = scmp.ne.s32.totalorder %s44, %s46
    %p53 = scmp.eq.s32.totalorder %s15, 1
    %p54 = por %p52, %p53
    %p55 = scmp.ne.s32.totalorder %s46, %s47
    %p56 = scmp.eq.s32.totalorder %s15, 0
    %p57 = por %p55, %p56
    %p58 = scmp.ne.s32.totalorder %s46, %s47
    %p59 = scmp.eq.s32.totalorder %s16, 1
    %p60 = por %p58, %p59
    %p62 = scmp.ne.s32.totalorder %s47, %s61
    %p63 = scmp.eq.s32.totalorder %s16, 0
    %p64 = por %p62, %p63
    %s66 = sadd.s32 %s65, 1
    %p69 = scmp.eq.s32.totalorder %s10, 1
    %p70 = scmp.ne.s32.totalorder %s65, %s67
    %p71 = scmp.eq.s32.totalorder %s10, 0
    %p72 = por %p70, %p71
    %p73 = scmp.ne.s32.totalorder %s65, %s67
    %p74 = scmp.eq.s32.totalorder %s15, 1
    %p75 = por %p73, %p74
    %p76 = scmp.ne.s32.totalorder %s67, %s68
    %p77 = scmp.eq.s32.totalorder %s15, 0
    %p78 = por %p76, %p77
    %p79 = scmp.ne.s32.totalorder %s67, %s68
    %p80 = scmp.eq.s32.totalorder %s16, 1
    %p81 = por %p79, %p80
    %p83 = scmp.ne.s32.totalorder %s68, %s82
    %p84 = scmp.eq.s32.totalorder %s16, 0
    %p85 = por %p83, %p84
    %s87 = sadd.s32 %s86, 1
    %p90 = scmp.eq.s32.totalorder %s10, 1
    %p91 = scmp.ne.s32.totalorder %s86, %s88
    %p92 = scmp.eq.s32.totalorder %s10, 0
    %p93 = por %p91, %p92
    %p94 = scmp.ne.s32.totalorder %s86, %s88
    %p95 = scmp.eq.s32.totalorder %s15, 1
    %p96 = por %p94, %p95
    %p97 = scmp.ne.s32.totalorder %s88, %s89
    %p98 = scmp.eq.s32.totalorder %s15, 0
    %p99 = por %p97, %p98
    %p100 = scmp.ne.s32.totalorder %s88, %s89
    %p101 = scmp.eq.s32.totalorder %s16, 1
    %p102 = por %p100, %p101
    %p104 = scmp.ne.s32.totalorder %s89, %s103
    %p105 = scmp.eq.s32.totalorder %s16, 0
    %p106 = por %p104, %p105
    %s107 = ssub.s32 %s10, %s17
    %p108 = scmp.eq.s32.totalorder %s107, 0
    %s110 = sadd.s32 %s109, 1
    %s111 = scalar_select %p108, %s109, %s110
    %p114 = pneg %p108
    %p115 = scmp.eq.s32.totalorder %s10, 1
    %p116 = por %p114, %p115
    %p117 = scmp.ne.s32.totalorder %s109, %s112
    %p118 = scmp.eq.s32.totalorder %s10, 0
    %p119 = por %p117, %p118
    %p120 = scmp.ne.s32.totalorder %s109, %s112
    %p121 = scmp.eq.s32.totalorder %s15, 1
    %p122 = por %p120, %p121
    %p123 = scmp.ne.s32.totalorder %s112, %s113
    %p124 = scmp.eq.s32.totalorder %s15, 0
    %p125 = por %p123, %p124
    %p126 = scmp.ne.s32.totalorder %s112, %s113
    %p127 = scmp.eq.s32.totalorder %s16, 1
    %p128 = por %p126, %p127
    %p130 = scmp.ne.s32.totalorder %s113, %s129
    %p131 = scmp.eq.s32.totalorder %s16, 0
    %p132 = por %p130, %p131
    %p133 = scmp.le.s32.totalorder 1, %s10
    %p134 = scmp.lt.s32.totalorder %s10, 3
    %p135 = pnand %p133, %p134
    %p136 = pneg %p135
    // Predicated region
    $region9: #{transformer_forward.6} parent=5 // pred_check
      _
    $region10: #{transformer_forward.6} parent=5 // pred_check_branch
      %138 = sbr.rel (%p135) target = $region12
    $region11: #{transformer_forward.6} parent=5 // pred_region
      %s139 = ssub.s32 %s10, 1
      // Predicated region
      $region13: #{transformer_forward.6} parent=11 // pred_check
        %p140 = pneg %p57
      $region14: #{transformer_forward.6} parent=11 // pred_check_branch
        %142 = sbr.rel (%p140) target = $region16
      $region15: #{transformer_forward.6} parent=11 // pred_region
        _
      $region16: #{transformer_forward.6} parent=11 // pred_fallthru
        _
      // Predicated region
      $region17: #{transformer_forward.6} parent=11 // pred_check
        %p143 = pneg %p78
      $region18: #{transformer_forward.6} parent=11 // pred_check_branch
        %145 = sbr.rel (%p143) target = $region20
      $region19: #{transformer_forward.6} parent=11 // pred_region
        _
      $region20: #{transformer_forward.6} parent=11 // pred_fallthru
        _
      // Predicated region
      $region21: #{transformer_forward.6} parent=11 // pred_check
        %p146 = pneg %p99
      $region22: #{transformer_forward.6} parent=11 // pred_check_branch
        %148 = sbr.rel (%p146) target = $region24
      $region23: #{transformer_forward.6} parent=11 // pred_region
        _
      $region24: #{transformer_forward.6} parent=11 // pred_fallthru
        _
    $region12: #{transformer_forward.6} parent=5 // pred_fallthru
      _
    %p149 = scmp.lt.s32.totalorder %s10, 2
    // Predicated region
    $region25: #{transformer_forward.6} parent=5 // pred_check
      %p150 = pneg %p149
    $region26: #{transformer_forward.6} parent=5 // pred_check_branch
      %152 = sbr.rel (%p150) target = $region28
    $region27: #{transformer_forward.6} parent=5 // pred_region
      // Predicated region
      $region29: #{transformer_forward.6} parent=27 // pred_check
        %p153 = pneg %p30
      $region30: #{transformer_forward.6} parent=27 // pred_check_branch
        %155 = sbr.rel (%p153) target = $region32
      $region31: #{transformer_forward.6} parent=27 // pred_region
        %p156 = scmp.lt.s32.totalorder %s10, 1
        %s157 = scalar_select %p156, %s10, 1
        %s158 = smul.addr %s157, 2
        %s159 = smul.addr %s158, 8
        %s160 = scalar_lea.vmem %s0, %s159
      $region32: #{transformer_forward.6} parent=27 // pred_fallthru
        _
    $region28: #{transformer_forward.6} parent=5 // pred_fallthru
      _
    %p161 = scmp.le.s32.totalorder 1, %s10
    %p162 = scmp.lt.s32.totalorder %s10, 3
    %p163 = pnand %p161, %p162
    %p164 = pneg %p163
    // Predicated region
    $region33: #{transformer_forward.6} parent=5 // pred_check
      _
    $region34: #{transformer_forward.6} parent=5 // pred_check_branch
      %166 = sbr.rel (%p163) target = $region36
    $region35: #{transformer_forward.6} parent=5 // pred_region
      %s167 = ssub.s32 %s10, 1
      %p168 = scmp.lt.s32.totalorder %s15, 1
      %s169 = scalar_select %p168, %s15, 1
      %s170 = smul.addr %s169, 2
      %s171 = smul.addr %s170, 8
      %s172 = scalar_lea.vmem %s0, %s171
      %p173 = pneg %p36
      %p174 = pneg %p33
      %p175 = pneg %p57
      %p176 = pneg %p54
      %p177 = pneg %p78
      %p178 = pneg %p75
      %p179 = pneg %p99
      %p180 = pneg %p96
      %p181 = pneg %p125
      %p182 = pneg %p122
      %p183 = scmp.lt.s32.totalorder %s15, 1
      %s184 = scalar_select %p183, %s15, 1
      %s185 = smul.addr %s184, 2
      %s186 = smul.addr %s185, 4
      %s187 = scalar_lea.vmem %s4, %s186
      %p188 = scmp.lt.s32.totalorder %s15, 1
      %s189 = scalar_select %p188, %s15, 1
      %s190 = smul.addr %s189, 2
      %s191 = smul.addr %s190, 8
      %s192 = scalar_lea.vmem %s0, %s191
      %p193 = scmp.lt.s32.totalorder %s15, 1
      %s194 = scalar_select %p193, %s15, 1
      %s195 = smul.addr %s194, 2
      %s196 = smul.addr %s195, 4
      %s197 = scalar_lea.vmem %s4, %s196
      %v198 = vld [vmem:[%s192] sm:$0xff]
      %v199 = vld [vmem:[%s192 + $0x8] sm:$0xff]
      %v200 = vld [vmem:[%s1] sm:$0xf]
      %v201 = vld [vmem:[%s3] sm:$0xff]
      %v202 = vld [vmem:[%s3 + $0x8] sm:$0xff]
      %v203 = vld [vmem:[%s2] sm:$0x1]
      %v205 = vlaneseq
      %v206 = vshrl.u32 %v205, 7
      %v207 = vsub.s32 0, %v206
      %v208 = vrot.slane %v203, %v207
      %v210 = vadd.f32 %v201, %v208
      %v211 = vadd.f32 %v202, %v208
      %213 = vset.pattern.permute.xlu0 0
      %214 = vperm.xlu0 %213, %v198
      %v215 = vpop.permute.xlu0 %214
      %218 = vset.pattern.permute.xlu0 0
      %219 = vperm.xlu0 %218, %v199
      %v220 = vpop.permute.xlu0 %219
      %v222 = vlaneseq
      %v223 = vshrl.u32 %v222, 7
      %v224 = vsub.s32 0, %v223
      %v225 = vrot.slane %v200, %v224
      %v226 = vmul.f32 %v215, %v225
      %v227 = vmul.f32 %v220, %v225
      %v228 = vadd.f32 %v210, %v226
      %v229 = vadd.f32 %v211, %v227
      %230 = vset.pattern.permute.xlu0 1
      %231 = vperm.xlu0 %230, %v198
      %v232 = vpop.permute.xlu0 %231
      %234 = vset.pattern.permute.xlu0 1
      %235 = vperm.xlu0 %234, %v199
      %v236 = vpop.permute.xlu0 %235
      %v238 = vlaneseq
      %v239 = vshrl.u32 %v238, 7
      %v240 = vsub.s32 1, %v239
      %v241 = vrot.slane %v200, %v240
      %v242 = vmul.f32 %v232, %v241
      %v243 = vmul.f32 %v236, %v241
      %v244 = vadd.f32 %v228, %v242
      %v245 = vadd.f32 %v229, %v243
      %246 = vset.pattern.permute.xlu0 2
      %247 = vperm.xlu0 %246, %v198
      %v248 = vpop.permute.xlu0 %247
      %250 = vset.pattern.permute.xlu0 2
      %251 = vperm.xlu0 %250, %v199
      %v252 = vpop.permute.xlu0 %251
      %v254 = vlaneseq
      %v255 = vshrl.u32 %v254, 7
      %v256 = vsub.s32 2, %v255
      %v257 = vrot.slane %v200, %v256
      %v258 = vmul.f32 %v248, %v257
      %v259 = vmul.f32 %v252, %v257
      %v260 = vadd.f32 %v244, %v258
      %v261 = vadd.f32 %v245, %v259
      %262 = vset.pattern.permute.xlu0 3
      %263 = vperm.xlu0 %262, %v198
      %v264 = vpop.permute.xlu0 %263
      %266 = vset.pattern.permute.xlu0 3
      %267 = vperm.xlu0 %266, %v199
      %v268 = vpop.permute.xlu0 %267
      %v270 = vlaneseq
      %v271 = vshrl.u32 %v270, 7
      %v272 = vsub.s32 3, %v271
      %v273 = vrot.slane %v200, %v272
      %v274 = vmul.f32 %v264, %v273
      %v275 = vmul.f32 %v268, %v273
      %v276 = vadd.f32 %v260, %v274
      %v277 = vadd.f32 %v261, %v275
      %v278 = vpack.c.bf16 %v277, %v276
      %v280 = vunpack.c.l.b16 %v278
      %v281 = vunpack.c.h.b16 %v278
      %v282 = vpack.c.b16 %v280, %v280
      %v283 = vpack.c.b16 %v281, %v281
      %vm286 = vcmask 257024
      %287 = vst.msk [vmem:[%s197] sm:$0xf] %vm286, %v282
      %288 = vst.msk [vmem:[%s197 + $0x4] sm:$0xf] %vm286, %v283
      %p289 = scmp.lt.s32.totalorder %s15, 1
      %s290 = scalar_select %p289, %s15, 1
      %s291 = smul.addr %s290, 2
      %s292 = smul.addr %s291, 4
      %s293 = scalar_lea.vmem %s4, %s292
      // Predicated region
      $region37: #{transformer_forward.6} parent=35 // pred_check
        %p294 = pneg %p122
      $region38: #{transformer_forward.6} parent=35 // pred_check_branch
        %296 = sbr.rel (%p294) target = $region40
      $region39: #{transformer_forward.6} parent=35 // pred_region
        _
      $region40: #{transformer_forward.6} parent=35 // pred_fallthru
        _
    $region36: #{transformer_forward.6} parent=5 // pred_fallthru
      _
    %p297 = scmp.le.s32.totalorder 2, %s10
    // Predicated region
    $region41: #{transformer_forward.6} parent=5 // pred_check
      %p298 = pneg %p297
    $region42: #{transformer_forward.6} parent=5 // pred_check_branch
      %300 = sbr.rel (%p298) target = $region44
    $region43: #{transformer_forward.6} parent=5 // pred_region
      %s301 = ssub.s32 %s10, 2
      // Predicated region
      $region45: #{transformer_forward.6} parent=43 // pred_check
        %p302 = pneg %p128
      $region46: #{transformer_forward.6} parent=43 // pred_check_branch
        %304 = sbr.rel (%p302) target = $region48
      $region47: #{transformer_forward.6} parent=43 // pred_region
        %p305 = scmp.lt.s32.totalorder %s16, 1
        %s306 = scalar_select %p305, %s16, 1
        %s307 = smul.addr %s306, 2
        %s308 = smul.addr %s307, 4
        %s309 = scalar_lea.vmem %s4, %s308
      $region48: #{transformer_forward.6} parent=43 // pred_fallthru
        _
    $region44: #{transformer_forward.6} parent=5 // pred_fallthru
      _
  $region6: #{transformer_forward.6} parent=0 // loop_footer
    %s14 = sadd.s32 1, %s10
  $region7: #{transformer_forward.6} parent=0 // loop_footer_branch
    %9 = sbr.rel target = $region3
  $region8: #{transformer_forward.6} parent=0 // loop_exit
    _

// kernel: transformer_forward.8
$region0: #{transformer_forward.8}
  #allocation0 [shape = 'u32[]', space=smem, size = 0x4, offset = 0x4, fixed_abs, tag = 'smem constant byte address 0x4 - core index']
  #allocation1 [shape = 'u32[144,128]{1,0:T(1,128)}', space=vmem, size = 0x12000, scoped, tag = 'internal scratch']
  %s0 = inlined_call_operand.vmem [shape: bf16[2,16,32], index: 0, kind: input, shape index: {}]
  %s1 = inlined_call_operand.vmem [shape: f32[1,32], index: 1, kind: input, shape index: {}]
  %s2 = inlined_call_operand.vmem [shape: f32[1,32], index: 2, kind: input, shape index: {}]
  %s3 = inlined_call_operand.vmem [shape: bf16[32,128], index: 3, kind: input, shape index: {}]
  %s4 = inlined_call_operand.vmem [shape: f32[1,128], index: 4, kind: input, shape index: {}]
  %s5 = inlined_call_operand.vmem [shape: bf16[128,32], index: 5, kind: input, shape index: {}]
  %s6 = inlined_call_operand.vmem [shape: f32[1,32], index: 6, kind: input, shape index: {}]
  %s7 = inlined_call_operand.vmem [shape: bf16[2,16,32], index: 7, kind: output, shape index: {}]
  %s8 = sld [smem:[#allocation0]]
  $region61: #{transformer_forward.8} parent=0
    _
  %s10 = ssub.s32 1, %s8
  %s11 = scalar_select 0, %s10, %s8
  loop: start=0, step=1, limit=4
  $region2: #{transformer_forward.8} parent=0 // loop_pre_header
    _
  $region3: #{transformer_forward.8} parent=0 // loop_header
    %s13 = sphi 0, %s17
    %p14 = scmp.ge.s32.totalorder %s13, 4
    %s23 = sphi 0, %s25
    %s26 = sphi 0, %s23
    %s27 = sphi 0, %s26
    %s43 = sphi 0, %s27
    %s47 = sphi 0, %s47
    %s49 = sphi 0, %s47
    %s50 = sphi 0, %s49
    %s64 = sphi 0, %s50
    %s68 = sphi 0, %s68
    %s70 = sphi 0, %s68
    %s71 = sphi 0, %s70
    %s85 = sphi 0, %s71
    %s89 = sphi 0, %s89
    %s91 = sphi 0, %s89
    %s92 = sphi 0, %s91
    %s106 = sphi 0, %s92
    %s110 = sphi 0, %s110
    %s112 = sphi 0, %s110
    %s113 = sphi 0, %s112
    %s127 = sphi 0, %s113
    %s131 = sphi 0, %s131
    %s133 = sphi 0, %s131
    %s134 = sphi 0, %s133
    %s148 = sphi 0, %s134
    %s152 = sphi 0, %s152
    %s154 = sphi 0, %s152
    %s155 = sphi 0, %s154
    %s169 = sphi 0, %s155
    %s175 = sphi 0, %s177
    %s178 = sphi 0, %s175
    %s179 = sphi 0, %s178
    %s195 = sphi 0, %s179
  $region4: #{transformer_forward.8} parent=0 // loop_header_branch
    %16 = sbr.rel (%p14) target = $region8
  $region5: #{transformer_forward.8} parent=0 // loop_body
    %s18 = ssub.s32 %s13, 1
    %s19 = ssub.s32 %s13, 2
    %s20 = sadd.s32 %s13, 1
    %s21 = ssub.s32 %s13, %s20
    %p22 = scmp.eq.s32.totalorder %s21, 0
    %s24 = sadd.s32 %s23, 1
    %s25 = scalar_select %p22, %s23, %s24
    %p28 = pneg %p22
    %p29 = scmp.eq.s32.totalorder %s13, 1
    %p30 = por %p28, %p29
    %p31 = scmp.ne.s32.totalorder %s23, %s26
    %p32 = scmp.eq.s32.totalorder %s13, 0
    %p33 = por %p31, %p32
    %p34 = scmp.ne.s32.totalorder %s23, %s26
    %p35 = scmp.eq.s32.totalorder %s18, 1
    %p36 = por %p34, %p35
    %p37 = scmp.ne.s32.totalorder %s26, %s27
    %p38 = scmp.eq.s32.totalorder %s18, 0
    %p39 = por %p37, %p38
    %p40 = scmp.ne.s32.totalorder %s26, %s27
    %p41 = scmp.eq.s32.totalorder %s19, 1
    %p42 = por %p40, %p41
    %p44 = scmp.ne.s32.totalorder %s27, %s43
    %p45 = scmp.eq.s32.totalorder %s19, 0
    %p46 = por %p44, %p45
    %s48 = sadd.s32 %s47, 1
    %p51 = scmp.eq.s32.totalorder %s13, 1
    %p52 = scmp.ne.s32.totalorder %s47, %s49
    %p53 = scmp.eq.s32.totalorder %s13, 0
    %p54 = por %p52, %p53
    %p55 = scmp.ne.s32.totalorder %s47, %s49
    %p56 = scmp.eq.s32.totalorder %s18, 1
    %p57 = por %p55, %p56
    %p58 = scmp.ne.s32.totalorder %s49, %s50
    %p59 = scmp.eq.s32.totalorder %s18, 0
    %p60 = por %p58, %p59
    %p61 = scmp.ne.s32.totalorder %s49, %s50
    %p62 = scmp.eq.s32.totalorder %s19, 1
    %p63 = por %p61, %p62
    %p65 = scmp.ne.s32.totalorder %s50, %s64
    %p66 = scmp.eq.s32.totalorder %s19, 0
    %p67 = por %p65, %p66
    %s69 = sadd.s32 %s68, 1
    %p72 = scmp.eq.s32.totalorder %s13, 1
    %p73 = scmp.ne.s32.totalorder %s68, %s70
    %p74 = scmp.eq.s32.totalorder %s13, 0
    %p75 = por %p73, %p74
    %p76 = scmp.ne.s32.totalorder %s68, %s70
    %p77 = scmp.eq.s32.totalorder %s18, 1
    %p78 = por %p76, %p77
    %p79 = scmp.ne.s32.totalorder %s70, %s71
    %p80 = scmp.eq.s32.totalorder %s18, 0
    %p81 = por %p79, %p80
    %p82 = scmp.ne.s32.totalorder %s70, %s71
    %p83 = scmp.eq.s32.totalorder %s19, 1
    %p84 = por %p82, %p83
    %p86 = scmp.ne.s32.totalorder %s71, %s85
    %p87 = scmp.eq.s32.totalorder %s19, 0
    %p88 = por %p86, %p87
    %s90 = sadd.s32 %s89, 1
    %p93 = scmp.eq.s32.totalorder %s13, 1
    %p94 = scmp.ne.s32.totalorder %s89, %s91
    %p95 = scmp.eq.s32.totalorder %s13, 0
    %p96 = por %p94, %p95
    %p97 = scmp.ne.s32.totalorder %s89, %s91
    %p98 = scmp.eq.s32.totalorder %s18, 1
    %p99 = por %p97, %p98
    %p100 = scmp.ne.s32.totalorder %s91, %s92
    %p101 = scmp.eq.s32.totalorder %s18, 0
    %p102 = por %p100, %p101
    %p103 = scmp.ne.s32.totalorder %s91, %s92
    %p104 = scmp.eq.s32.totalorder %s19, 1
    %p105 = por %p103, %p104
    %p107 = scmp.ne.s32.totalorder %s92, %s106
    %p108 = scmp.eq.s32.totalorder %s19, 0
    %p109 = por %p107, %p108
    %s111 = sadd.s32 %s110, 1
    %p114 = scmp.eq.s32.totalorder %s13, 1
    %p115 = scmp.ne.s32.totalorder %s110, %s112
    %p116 = scmp.eq.s32.totalorder %s13, 0
    %p117 = por %p115, %p116
    %p118 = scmp.ne.s32.totalorder %s110, %s112
    %p119 = scmp.eq.s32.totalorder %s18, 1
    %p120 = por %p118, %p119
    %p121 = scmp.ne.s32.totalorder %s112, %s113
    %p122 = scmp.eq.s32.totalorder %s18, 0
    %p123 = por %p121, %p122
    %p124 = scmp.ne.s32.totalorder %s112, %s113
    %p125 = scmp.eq.s32.totalorder %s19, 1
    %p126 = por %p124, %p125
    %p128 = scmp.ne.s32.totalorder %s113, %s127
    %p129 = scmp.eq.s32.totalorder %s19, 0
    %p130 = por %p128, %p129
    %s132 = sadd.s32 %s131, 1
    %p135 = scmp.eq.s32.totalorder %s13, 1
    %p136 = scmp.ne.s32.totalorder %s131, %s133
    %p137 = scmp.eq.s32.totalorder %s13, 0
    %p138 = por %p136, %p137
    %p139 = scmp.ne.s32.totalorder %s131, %s133
    %p140 = scmp.eq.s32.totalorder %s18, 1
    %p141 = por %p139, %p140
    %p142 = scmp.ne.s32.totalorder %s133, %s134
    %p143 = scmp.eq.s32.totalorder %s18, 0
    %p144 = por %p142, %p143
    %p145 = scmp.ne.s32.totalorder %s133, %s134
    %p146 = scmp.eq.s32.totalorder %s19, 1
    %p147 = por %p145, %p146
    %p149 = scmp.ne.s32.totalorder %s134, %s148
    %p150 = scmp.eq.s32.totalorder %s19, 0
    %p151 = por %p149, %p150
    %s153 = sadd.s32 %s152, 1
    %p156 = scmp.eq.s32.totalorder %s13, 1
    %p157 = scmp.ne.s32.totalorder %s152, %s154
    %p158 = scmp.eq.s32.totalorder %s13, 0
    %p159 = por %p157, %p158
    %p160 = scmp.ne.s32.totalorder %s152, %s154
    %p161 = scmp.eq.s32.totalorder %s18, 1
    %p162 = por %p160, %p161
    %p163 = scmp.ne.s32.totalorder %s154, %s155
    %p164 = scmp.eq.s32.totalorder %s18, 0
    %p165 = por %p163, %p164
    %p166 = scmp.ne.s32.totalorder %s154, %s155
    %p167 = scmp.eq.s32.totalorder %s19, 1
    %p168 = por %p166, %p167
    %p170 = scmp.ne.s32.totalorder %s155, %s169
    %p171 = scmp.eq.s32.totalorder %s19, 0
    %p172 = por %p170, %p171
    %s173 = ssub.s32 %s13, %s20
    %p174 = scmp.eq.s32.totalorder %s173, 0
    %s176 = sadd.s32 %s175, 1
    %s177 = scalar_select %p174, %s175, %s176
    %p180 = pneg %p174
    %p181 = scmp.eq.s32.totalorder %s13, 1
    %p182 = por %p180, %p181
    %p183 = scmp.ne.s32.totalorder %s175, %s178
    %p184 = scmp.eq.s32.totalorder %s13, 0
    %p185 = por %p183, %p184
    %p186 = scmp.ne.s32.totalorder %s175, %s178
    %p187 = scmp.eq.s32.totalorder %s18, 1
    %p188 = por %p186, %p187
    %p189 = scmp.ne.s32.totalorder %s178, %s179
    %p190 = scmp.eq.s32.totalorder %s18, 0
    %p191 = por %p189, %p190
    %p192 = scmp.ne.s32.totalorder %s178, %s179
    %p193 = scmp.eq.s32.totalorder %s19, 1
    %p194 = por %p192, %p193
    %p196 = scmp.ne.s32.totalorder %s179, %s195
    %p197 = scmp.eq.s32.totalorder %s19, 0
    %p198 = por %p196, %p197
    %p199 = scmp.le.s32.totalorder 1, %s13
    %p200 = scmp.lt.s32.totalorder %s13, 3
    %p201 = pnand %p199, %p200
    %p202 = pneg %p201
    // Predicated region
    $region9: #{transformer_forward.8} parent=5 // pred_check
      _
    $region10: #{transformer_forward.8} parent=5 // pred_check_branch
      %204 = sbr.rel (%p201) target = $region12
    $region11: #{transformer_forward.8} parent=5 // pred_region
      %s205 = ssub.s32 %s13, 1
      // Predicated region
      $region13: #{transformer_forward.8} parent=11 // pred_check
        %p206 = pneg %p60
      $region14: #{transformer_forward.8} parent=11 // pred_check_branch
        %208 = sbr.rel (%p206) target = $region16
      $region15: #{transformer_forward.8} parent=11 // pred_region
        _
      $region16: #{transformer_forward.8} parent=11 // pred_fallthru
        _
      // Predicated region
      $region17: #{transformer_forward.8} parent=11 // pred_check
        %p209 = pneg %p81
      $region18: #{transformer_forward.8} parent=11 // pred_check_branch
        %211 = sbr.rel (%p209) target = $region20
      $region19: #{transformer_forward.8} parent=11 // pred_region
        _
      $region20: #{transformer_forward.8} parent=11 // pred_fallthru
        _
      // Predicated region
      $region21: #{transformer_forward.8} parent=11 // pred_check
        %p212 = pneg %p102
      $region22: #{transformer_forward.8} parent=11 // pred_check_branch
        %214 = sbr.rel (%p212) target = $region24
      $region23: #{transformer_forward.8} parent=11 // pred_region
        _
      $region24: #{transformer_forward.8} parent=11 // pred_fallthru
        _
      // Predicated region
      $region25: #{transformer_forward.8} parent=11 // pred_check
        %p215 = pneg %p123
      $region26: #{transformer_forward.8} parent=11 // pred_check_branch
        %217 = sbr.rel (%p215) target = $region28
      $region27: #{transformer_forward.8} parent=11 // pred_region
        _
      $region28: #{transformer_forward.8} parent=11 // pred_fallthru
        _
      // Predicated region
      $region29: #{transformer_forward.8} parent=11 // pred_check
        %p218 = pneg %p144
      $region30: #{transformer_forward.8} parent=11 // pred_check_branch
        %220 = sbr.rel (%p218) target = $region32
      $region31: #{transformer_forward.8} parent=11 // pred_region
        _
      $region32: #{transformer_forward.8} parent=11 // pred_fallthru
        _
      // Predicated region
      $region33: #{transformer_forward.8} parent=11 // pred_check
        %p221 = pneg %p165
      $region34: #{transformer_forward.8} parent=11 // pred_check_branch
        %223 = sbr.rel (%p221) target = $region36
      $region35: #{transformer_forward.8} parent=11 // pred_region
        _
      $region36: #{transformer_forward.8} parent=11 // pred_fallthru
        _
    $region12: #{transformer_forward.8} parent=5 // pred_fallthru
      _
    %p224 = scmp.lt.s32.totalorder %s13, 2
    // Predicated region
    $region37: #{transformer_forward.8} parent=5 // pred_check
      %p225 = pneg %p224
    $region38: #{transformer_forward.8} parent=5 // pred_check_branch
      %227 = sbr.rel (%p225) target = $region40
    $region39: #{transformer_forward.8} parent=5 // pred_region
      // Predicated region
      $region41: #{transformer_forward.8} parent=39 // pred_check
        %p228 = pneg %p33
      $region42: #{transformer_forward.8} parent=39 // pred_check_branch
        %230 = sbr.rel (%p228) target = $region44
      $region43: #{transformer_forward.8} parent=39 // pred_region
        %p231 = scmp.lt.s32.totalorder %s13, 1
        %s232 = scalar_select %p231, %s13, 1
        %s233 = smul.addr %s232, 2
        %s234 = smul.addr %s233, 4
        %s235 = scalar_lea.vmem %s0, %s234
      $region44: #{transformer_forward.8} parent=39 // pred_fallthru
        _
    $region40: #{transformer_forward.8} parent=5 // pred_fallthru
      _
    %p236 = scmp.le.s32.totalorder 1, %s13
    %p237 = scmp.lt.s32.totalorder %s13, 3
    %p238 = pnand %p236, %p237
    %p239 = pneg %p238
    // Predicated region
    $region45: #{transformer_forward.8} parent=5 // pred_check
      _
    $region46: #{transformer_forward.8} parent=5 // pred_check_branch
      %241 = sbr.rel (%p238) target = $region48
    $region47: #{transformer_forward.8} parent=5 // pred_region
      %s242 = ssub.s32 %s13, 1
      %p243 = scmp.lt.s32.totalorder %s18, 1
      %s244 = scalar_select %p243, %s18, 1
      %s245 = smul.addr %s244, 2
      %s246 = smul.addr %s245, 4
      %s247 = scalar_lea.vmem %s0, %s246
      %p248 = pneg %p39
      %p249 = pneg %p36
      %p250 = pneg %p60
      %p251 = pneg %p57
      %p252 = pneg %p81
      %p253 = pneg %p78
      %p254 = pneg %p102
      %p255 = pneg %p99
      %p256 = pneg %p123
      %p257 = pneg %p120
      %p258 = pneg %p144
      %p259 = pneg %p141
      %p260 = pneg %p165
      %p261 = pneg %p162
      %p262 = pneg %p191
      %p263 = pneg %p188
      %p264 = scmp.lt.s32.totalorder %s18, 1
      %s265 = scalar_select %p264, %s18, 1
      %s266 = smul.addr %s265, 2
      %s267 = smul.addr %s266, 4
      %s268 = scalar_lea.vmem %s7, %s267
      %p269 = scmp.lt.s32.totalorder %s18, 1
      %s270 = scalar_select %p269, %s18, 1
      %s271 = smul.addr %s270, 2
      %s272 = smul.addr %s271, 4
      %s273 = scalar_lea.vmem %s0, %s272
      %p274 = scmp.lt.s32.totalorder %s18, 1
      %s275 = scalar_select %p274, %s18, 1
      %s276 = smul.addr %s275, 2
      %s277 = smul.addr %s276, 4
      %s278 = scalar_lea.vmem %s7, %s277
      %v280 = vld [vmem:[%s273] sm:$0xf]
      %v281 = vld [vmem:[%s273 + $0x4] sm:$0xf]
      %v282 = vunpack.c.l.bf16 %v280
      %v283 = vunpack.c.l.bf16 %v281
      %v284 = vld [vmem:[%s1] sm:$0x1]
      %v285 = vld [vmem:[%s2] sm:$0x1]
      %vm286 = vcmask 261120
      %v287 = vsel %vm286, %v282, 0.0
      %288 = vadd.xlane.f32.xlu0 %v287
      %v289 = vpop.xlane.xlu0 %288
      %v290 = vsel %vm286, %v283, 0.0
      %291 = vadd.xlane.f32.xlu0 %v290
      %v292 = vpop.xlane.xlu0 %291
      %v293 = vrcp.pop 32.0
      %v294 = vmul.f32 %v289, %v293
      %v295 = vmul.f32 %v292, %v293
      %v296 = vsub.f32 %v282, %v294
      %v297 = vsub.f32 %v283, %v295
      %v298 = vmul.f32 %v296, %v296
      %v299 = vmul.f32 %v297, %v297
      %v300 = vsel %vm286, %v298, 0.0
      %301 = vadd.xlane.f32.xlu0 %v300
      %v302 = vpop.xlane.xlu0 %301
      %v303 = vsel %vm286, %v299, 0.0
      %304 = vadd.xlane.f32.xlu0 %v303
      %v305 = vpop.xlane.xlu0 %304
      %v306 = vmul.f32 %v302, %v293
      %v307 = vmul.f32 %v305, %v293
      %v308 = vadd.f32 %v306, 1e-05
      %v309 = vadd.f32 %v307, 1e-05
      %v310 = vrsqrt.pop %v308
      %v311 = vrsqrt.pop %v309
      %v312 = vmul.f32 %v296, %v310
      %v313 = vmul.f32 %v297, %v311
      %v315 = vlaneseq
      %v316 = vshrl.u32 %v315, 7
      %v317 = vsub.s32 0, %v316
      %v318 = vrot.slane %v284, %v317
      %v320 = vmul.f32 %v312, %v318
      %v321 = vmul.f32 %v313, %v318
      %v323 = vlaneseq
      %v324 = vshrl.u32 %v323, 7
      %v325 = vsub.s32 0, %v324
      %v326 = vrot.slane %v285, %v325
      %v328 = vadd.f32 %v320, %v326
      %v329 = vadd.f32 %v321, %v326
      %v330 = vpack.c.bf16 %v329, %v328
      %v331 = vld [vmem:[%s3] sm:$0xf]
      %v332 = vld [vmem:[%s3 + $0x4] sm:$0xf]
      %v333 = vld [vmem:[%s3 + $0x8] sm:$0xf]
      %v334 = vld [vmem:[%s3 + $0xc] sm:$0xf]
      %v335 = vld [vmem:[%s4] sm:$0x1]
      %v337 = vlaneseq
      %v338 = vshrl.u32 %v337, 7
      %v339 = vsub.s32 0, %v338
      %v340 = vrot.slane %v335, %v339
      %v346 = vunpack.c.l.b16 %v331
      %v347 = vunpack.c.l.b16 %v332
      %v348 = vunpack.c.l.b16 %v333
      %v349 = vunpack.c.l.b16 %v334
      %v350 = vpack.c.b16 %v347, %v346
      %v351 = vpack.c.b16 %v349, %v348
      %v355 = vsel %vm286, %v330, 0
      %357 = vmatprep.subr.bf16.mxu0 0
      %358 = vmatpush1.bf16.msra.mxu0 0
      %359 = vmatprep.subr.bf16.mxu0 0
      %360 = vmatpush1.bf16.msra.mxu0 0
      %361 = vmatprep.subr.bf16.mxu0 0
      %362 = vmatpush1.bf16.msra.mxu0 0
      %363 = vmatprep.subr.bf16.mxu0 0
      %364 = vmatpush1.bf16.msra.mxu0 0
      %365 = vmatprep.subr.bf16.mxu0 0
      %366 = vmatpush1.bf16.msra.mxu0 0
      %367 = vmatprep.subr.bf16.mxu0 0
      %368 = vmatpush1.bf16.msra.mxu0 0
      %369 = vmatprep.subr.bf16.mxu0 0
      %370 = vmatpush1.bf16.msra.mxu0 %v351
      %371 = vmatprep.subr.bf16.mxu0 0
      %372 = vmatpush1.bf16.msra.mxu0 %v350
      %373 = vmatprep.subr.bf16.mxu0 0
      %374 = vmatpush2.bf16.msra.mxu0 0
      %375 = vmatprep.subr.bf16.mxu0 0
      %376 = vmatpush2.bf16.msra.mxu0 0
      %377 = vmatprep.subr.bf16.mxu0 0
      %378 = vmatpush2.bf16.msra.mxu0 0
      %379 = vmatprep.subr.bf16.mxu0 0
      %380 = vmatpush2.bf16.msra.mxu0 0
      %381 = vmatprep.subr.bf16.mxu0 0
      %382 = vmatpush2.bf16.msra.mxu0 0
      %383 = vmatprep.subr.bf16.mxu0 0
      %384 = vmatpush2.bf16.msra.mxu0 0
      %385 = vmatprep.subr.bf16.mxu0 0
      %386 = vmatpush2.bf16.msra.mxu0 0
      %387 = vmatprep.subr.bf16.mxu0 0
      %388 = vmatpush2.bf16.msra.mxu0 0
      %389 = vmatprep.mubr.bf16.mxu0 0
      %390 = vmatmul.mubr.bf16.gmra.mxu0 %v355
      %v391 = vpop.f32.mrf.mxu0
      %v392 = vadd.f32 %v340, %v391
      %v393 = vpop.f32.mrf.mxu0
      %v394 = vpop.f32.mrf.mxu0
      %v395 = vadd.f32 %v340, %v394
      %v396 = vpop.f32.mrf.mxu0
      %397 = vdwg.mxu0
      %v398 = vmul.f32 %v392, 0.5
      %v399 = vmul.f32 %v395, 0.5
      %v400 = vmul.f32 %v392, 0.044715
      %v401 = vmul.f32 %v395, 0.044715
      %v402 = vmul.f32 %v400, %v392
      %v403 = vmul.f32 %v401, %v395
      %v404 = vmul.f32 %v402, %v392
      %v405 = vmul.f32 %v403, %v395
      %v406 = vadd.f32 %v392, %v404
      %v407 = vadd.f32 %v395, %v405
      %v408 = vmul.f32 %v406, 0.7978846
      %v409 = vmul.f32 %v407, 0.7978846
      %v410 = vtanh.pop %v408
      %v411 = vtanh.pop %v409
      %v412 = vadd.f32 %v410, 1.0
      %v413 = vadd.f32 %v411, 1.0
      %v414 = vmul.f32 %v398, %v412
      %v415 = vmul.f32 %v399, %v413
      %v416 = vpack.c.bf16 %v415, %v414
      %v417 = vld [vmem:[%s5] sm:$0xf]
      %v418 = vld [vmem:[%s5 + $0x4] sm:$0xf]
      %v419 = vld [vmem:[%s5 + $0x8] sm:$0xf]
      %v420 = vld [vmem:[%s5 + $0xc] sm:$0xf]
      %v421 = vld [vmem:[%s5 + $0x10] sm:$0xf]
      %v422 = vld [vmem:[%s5 + $0x14] sm:$0xf]
      %v423 = vld [vmem:[%s5 + $0x18] sm:$0xf]
      %v424 = vld [vmem:[%s5 + $0x1c] sm:$0xf]
      %v425 = vld [vmem:[%s5 + $0x20] sm:$0xf]
      %v426 = vld [vmem:[%s5 + $0x24] sm:$0xf]
      %v427 = vld [vmem:[%s5 + $0x28] sm:$0xf]
      %v428 = vld [vmem:[%s5 + $0x2c] sm:$0xf]
      %v429 = vld [vmem:[%s5 + $0x30] sm:$0xf]
      %v430 = vld [vmem:[%s5 + $0x34] sm:$0xf]
      %v431 = vld [vmem:[%s5 + $0x38] sm:$0xf]
      %v432 = vld [vmem:[%s5 + $0x3c] sm:$0xf]
      %v433 = vld [vmem:[%s6] sm:$0x1]
      %v435 = vlaneseq
      %v436 = vshrl.u32 %v435, 7
      %v437 = vsub.s32 0, %v436
      %v438 = vrot.slane %v433, %v437
      %v456 = vunpack.c.l.b16 %v417
      %v457 = vunpack.c.l.b16 %v418
      %v458 = vunpack.c.l.b16 %v419
      %v459 = vunpack.c.l.b16 %v420
      %v460 = vunpack.c.l.b16 %v421
      %v461 = vunpack.c.l.b16 %v422
      %v462 = vunpack.c.l.b16 %v423
      %v463 = vunpack.c.l.b16 %v424
      %v464 = vunpack.c.l.b16 %v425
      %v465 = vunpack.c.l.b16 %v426
      %v466 = vunpack.c.l.b16 %v427
      %v467 = vunpack.c.l.b16 %v428
      %v468 = vunpack.c.l.b16 %v429
      %v469 = vunpack.c.l.b16 %v430
      %v470 = vunpack.c.l.b16 %v431
      %v471 = vunpack.c.l.b16 %v432
      %v472 = vpack.c.b16 %v457, %v456
      %v473 = vpack.c.b16 %v459, %v458
      %v474 = vpack.c.b16 %v461, %v460
      %v475 = vpack.c.b16 %v463, %v462
      %v476 = vpack.c.b16 %v465, %v464
      %v477 = vpack.c.b16 %v467, %v466
      %v478 = vpack.c.b16 %v469, %v468
      %v479 = vpack.c.b16 %v471, %v470
      %488 = vmatprep.subr.bf16.mxu0 0
      %489 = vmatpush1.bf16.msra.mxu0 %v479
      %490 = vmatprep.subr.bf16.mxu0 0
      %491 = vmatpush1.bf16.msra.mxu0 %v478
      %492 = vmatprep.subr.bf16.mxu0 0
      %493 = vmatpush1.bf16.msra.mxu0 %v477
      %494 = vmatprep.subr.bf16.mxu0 0
      %495 = vmatpush1.bf16.msra.mxu0 %v476
      %496 = vmatprep.subr.bf16.mxu0 0
      %497 = vmatpush1.bf16.msra.mxu0 %v475
      %498 = vmatprep.subr.bf16.mxu0 0
      %499 = vmatpush1.bf16.msra.mxu0 %v474
      %500 = vmatprep.subr.bf16.mxu0 0
      %501 = vmatpush1.bf16.msra.mxu0 %v473
      %502 = vmatprep.subr.bf16.mxu0 0
      %503 = vmatpush1.bf16.msra.mxu0 %v472
      %504 = vmatprep.subr.bf16.mxu0 0
      %505 = vmatpush2.bf16.msra.mxu0 0
      %506 = vmatprep.subr.bf16.mxu0 0
      %507 = vmatpush2.bf16.msra.mxu0 0
      %508 = vmatprep.subr.bf16.mxu0 0
      %509 = vmatpush2.bf16.msra.mxu0 0
      %510 = vmatprep.subr.bf16.mxu0 0
      %511 = vmatpush2.bf16.msra.mxu0 0
      %512 = vmatprep.subr.bf16.mxu0 0
      %513 = vmatpush2.bf16.msra.mxu0 0
      %514 = vmatprep.subr.bf16.mxu0 0
      %515 = vmatpush2.bf16.msra.mxu0 0
      %516 = vmatprep.subr.bf16.mxu0 0
      %517 = vmatpush2.bf16.msra.mxu0 0
      %518 = vmatprep.subr.bf16.mxu0 0
      %519 = vmatpush2.bf16.msra.mxu0 0
      %520 = vmatprep.mubr.bf16.mxu0 0
      %521 = vmatmul.mubr.bf16.gmra.mxu0 %v416
      %v522 = vpop.f32.mrf.mxu0
      %v523 = vadd.f32 %v438, %v522
      %v524 = vpop.f32.mrf.mxu0
      %v525 = vpop.f32.mrf.mxu0
      %v526 = vadd.f32 %v438, %v525
      %v527 = vpop.f32.mrf.mxu0
      %528 = vdwg.mxu0
      %v529 = vadd.f32 %v523, %v282
      %v530 = vadd.f32 %v526, %v283
      %v531 = vpack.c.bf16 %v530, %v529
      %v533 = vunpack.c.l.b16 %v531
      %v534 = vunpack.c.h.b16 %v531
      %v535 = vpack.c.b16 %v533, %v533
      %v536 = vpack.c.b16 %v534, %v534
      %vm539 = vcmask 257024
      %540 = vst.msk [vmem:[%s278] sm:$0xf] %vm539, %v535
      %541 = vst.msk [vmem:[%s278 + $0x4] sm:$0xf] %vm539, %v536
      %p542 = scmp.lt.s32.totalorder %s18, 1
      %s543 = scalar_select %p542, %s18, 1
      %s544 = smul.addr %s543, 2
      %s545 = smul.addr %s544, 4
      %s546 = scalar_lea.vmem %s7, %s545
      // Predicated region
      $region49: #{transformer_forward.8} parent=47 // pred_check
        %p547 = pneg %p188
      $region50: #{transformer_forward.8} parent=47 // pred_check_branch
        %549 = sbr.rel (%p547) target = $region52
      $region51: #{transformer_forward.8} parent=47 // pred_region
        _
      $region52: #{transformer_forward.8} parent=47 // pred_fallthru
        _
    $region48: #{transformer_forward.8} parent=5 // pred_fallthru
      _
    %p550 = scmp.le.s32.totalorder 2, %s13
    // Predicated region
    $region53: #{transformer_forward.8} parent=5 // pred_check
      %p551 = pneg %p550
    $region54: #{transformer_forward.8} parent=5 // pred_check_branch
      %553 = sbr.rel (%p551) target = $region56
    $region55: #{transformer_forward.8} parent=5 // pred_region
      %s554 = ssub.s32 %s13, 2
      // Predicated region
      $region57: #{transformer_forward.8} parent=55 // pred_check
        %p555 = pneg %p194
      $region58: #{transformer_forward.8} parent=55 // pred_check_branch
        %557 = sbr.rel (%p555) target = $region60
      $region59: #{transformer_forward.8} parent=55 // pred_region
        %p558 = scmp.lt.s32.totalorder %s19, 1
        %s559 = scalar_select %p558, %s19, 1
        %s560 = smul.addr %s559, 2
        %s561 = smul.addr %s560, 4
        %s562 = scalar_lea.vmem %s7, %s561
      $region60: #{transformer_forward.8} parent=55 // pred_fallthru
        _
    $region56: #{transformer_forward.8} parent=5 // pred_fallthru
      _
  $region6: #{transformer_forward.8} parent=0 // loop_footer
    %s17 = sadd.s32 1, %s13
  $region7: #{transformer_forward.8} parent=0 // loop_footer_branch
    %12 = sbr.rel target = $region3
  $region8: #{transformer_forward.8} parent=0 // loop_exit
    _

// kernel: transformer_forward.11
$region0: #{transformer_forward.11}
  #allocation0 [shape = 'u32[]', space=smem, size = 0x4, offset = 0x4, fixed_abs, tag = 'smem constant byte address 0x4 - core index']
  #allocation1 [shape = 'u32[144,128]{1,0:T(1,128)}', space=vmem, size = 0x12000, scoped, tag = 'internal scratch']
  %s0 = inlined_call_operand.vmem [shape: bf16[2,16,32], index: 0, kind: input, shape index: {}]
  %s1 = inlined_call_operand.vmem [shape: f32[1,32], index: 1, kind: input, shape index: {}]
  %s2 = inlined_call_operand.vmem [shape: f32[1,32], index: 2, kind: input, shape index: {}]
  %s3 = inlined_call_operand.vmem [shape: bf16[32,128], index: 3, kind: input, shape index: {}]
  %s4 = inlined_call_operand.vmem [shape: f32[1,128], index: 4, kind: input, shape index: {}]
  %s5 = inlined_call_operand.vmem [shape: f32[2,16,128], index: 5, kind: output, shape index: {}]
  %s6 = sld [smem:[#allocation0]]
  $region53: #{transformer_forward.11} parent=0
    _
  %s8 = ssub.s32 1, %s6
  %s9 = scalar_select 0, %s8, %s6
  loop: start=0, step=1, limit=4
  $region2: #{transformer_forward.11} parent=0 // loop_pre_header
    _
  $region3: #{transformer_forward.11} parent=0 // loop_header
    %s11 = sphi 0, %s15
    %p12 = scmp.ge.s32.totalorder %s11, 4
    %s21 = sphi 0, %s23
    %s24 = sphi 0, %s21
    %s25 = sphi 0, %s24
    %s41 = sphi 0, %s25
    %s45 = sphi 0, %s45
    %s47 = sphi 0, %s45
    %s48 = sphi 0, %s47
    %s62 = sphi 0, %s48
    %s66 = sphi 0, %s66
    %s68 = sphi 0, %s66
    %s69 = sphi 0, %s68
    %s83 = sphi 0, %s69
    %s87 = sphi 0, %s87
    %s89 = sphi 0, %s87
    %s90 = sphi 0, %s89
    %s104 = sphi 0, %s90
    %s108 = sphi 0, %s108
    %s110 = sphi 0, %s108
    %s111 = sphi 0, %s110
    %s125 = sphi 0, %s111
    %s131 = sphi 0, %s133
    %s134 = sphi 0, %s131
    %s135 = sphi 0, %s134
    %s151 = sphi 0, %s135
  $region4: #{transformer_forward.11} parent=0 // loop_header_branch
    %14 = sbr.rel (%p12) target = $region8
  $region5: #{transformer_forward.11} parent=0 // loop_body
    %s16 = ssub.s32 %s11, 1
    %s17 = ssub.s32 %s11, 2
    %s18 = sadd.s32 %s11, 1
    %s19 = ssub.s32 %s11, %s18
    %p20 = scmp.eq.s32.totalorder %s19, 0
    %s22 = sadd.s32 %s21, 1
    %s23 = scalar_select %p20, %s21, %s22
    %p26 = pneg %p20
    %p27 = scmp.eq.s32.totalorder %s11, 1
    %p28 = por %p26, %p27
    %p29 = scmp.ne.s32.totalorder %s21, %s24
    %p30 = scmp.eq.s32.totalorder %s11, 0
    %p31 = por %p29, %p30
    %p32 = scmp.ne.s32.totalorder %s21, %s24
    %p33 = scmp.eq.s32.totalorder %s16, 1
    %p34 = por %p32, %p33
    %p35 = scmp.ne.s32.totalorder %s24, %s25
    %p36 = scmp.eq.s32.totalorder %s16, 0
    %p37 = por %p35, %p36
    %p38 = scmp.ne.s32.totalorder %s24, %s25
    %p39 = scmp.eq.s32.totalorder %s17, 1
    %p40 = por %p38, %p39
    %p42 = scmp.ne.s32.totalorder %s25, %s41
    %p43 = scmp.eq.s32.totalorder %s17, 0
    %p44 = por %p42, %p43
    %s46 = sadd.s32 %s45, 1
    %p49 = scmp.eq.s32.totalorder %s11, 1
    %p50 = scmp.ne.s32.totalorder %s45, %s47
    %p51 = scmp.eq.s32.totalorder %s11, 0
    %p52 = por %p50, %p51
    %p53 = scmp.ne.s32.totalorder %s45, %s47
    %p54 = scmp.eq.s32.totalorder %s16, 1
    %p55 = por %p53, %p54
    %p56 = scmp.ne.s32.totalorder %s47, %s48
    %p57 = scmp.eq.s32.totalorder %s16, 0
    %p58 = por %p56, %p57
    %p59 = scmp.ne.s32.totalorder %s47, %s48
    %p60 = scmp.eq.s32.totalorder %s17, 1
    %p61 = por %p59, %p60
    %p63 = scmp.ne.s32.totalorder %s48, %s62
    %p64 = scmp.eq.s32.totalorder %s17, 0
    %p65 = por %p63, %p64
    %s67 = sadd.s32 %s66, 1
    %p70 = scmp.eq.s32.totalorder %s11, 1
    %p71 = scmp.ne.s32.totalorder %s66, %s68
    %p72 = scmp.eq.s32.totalorder %s11, 0
    %p73 = por %p71, %p72
    %p74 = scmp.ne.s32.totalorder %s66, %s68
    %p75 = scmp.eq.s32.totalorder %s16, 1
    %p76 = por %p74, %p75
    %p77 = scmp.ne.s32.totalorder %s68, %s69
    %p78 = scmp.eq.s32.totalorder %s16, 0
    %p79 = por %p77, %p78
    %p80 = scmp.ne.s32.totalorder %s68, %s69
    %p81 = scmp.eq.s32.totalorder %s17, 1
    %p82 = por %p80, %p81
    %p84 = scmp.ne.s32.totalorder %s69, %s83
    %p85 = scmp.eq.s32.totalorder %s17, 0
    %p86 = por %p84, %p85
    %s88 = sadd.s32 %s87, 1
    %p91 = scmp.eq.s32.totalorder %s11, 1
    %p92 = scmp.ne.s32.totalorder %s87, %s89
    %p93 = scmp.eq.s32.totalorder %s11, 0
    %p94 = por %p92, %p93
    %p95 = scmp.ne.s32.totalorder %s87, %s89
    %p96 = scmp.eq.s32.totalorder %s16, 1
    %p97 = por %p95, %p96
    %p98 = scmp.ne.s32.totalorder %s89, %s90
    %p99 = scmp.eq.s32.totalorder %s16, 0
    %p100 = por %p98, %p99
    %p101 = scmp.ne.s32.totalorder %s89, %s90
    %p102 = scmp.eq.s32.totalorder %s17, 1
    %p103 = por %p101, %p102
    %p105 = scmp.ne.s32.totalorder %s90, %s104
    %p106 = scmp.eq.s32.totalorder %s17, 0
    %p107 = por %p105, %p106
    %s109 = sadd.s32 %s108, 1
    %p112 = scmp.eq.s32.totalorder %s11, 1
    %p113 = scmp.ne.s32.totalorder %s108, %s110
    %p114 = scmp.eq.s32.totalorder %s11, 0
    %p115 = por %p113, %p114
    %p116 = scmp.ne.s32.totalorder %s108, %s110
    %p117 = scmp.eq.s32.totalorder %s16, 1
    %p118 = por %p116, %p117
    %p119 = scmp.ne.s32.totalorder %s110, %s111
    %p120 = scmp.eq.s32.totalorder %s16, 0
    %p121 = por %p119, %p120
    %p122 = scmp.ne.s32.totalorder %s110, %s111
    %p123 = scmp.eq.s32.totalorder %s17, 1
    %p124 = por %p122, %p123
    %p126 = scmp.ne.s32.totalorder %s111, %s125
    %p127 = scmp.eq.s32.totalorder %s17, 0
    %p128 = por %p126, %p127
    %s129 = ssub.s32 %s11, %s18
    %p130 = scmp.eq.s32.totalorder %s129, 0
    %s132 = sadd.s32 %s131, 1
    %s133 = scalar_select %p130, %s131, %s132
    %p136 = pneg %p130
    %p137 = scmp.eq.s32.totalorder %s11, 1
    %p138 = por %p136, %p137
    %p139 = scmp.ne.s32.totalorder %s131, %s134
    %p140 = scmp.eq.s32.totalorder %s11, 0
    %p141 = por %p139, %p140
    %p142 = scmp.ne.s32.totalorder %s131, %s134
    %p143 = scmp.eq.s32.totalorder %s16, 1
    %p144 = por %p142, %p143
    %p145 = scmp.ne.s32.totalorder %s134, %s135
    %p146 = scmp.eq.s32.totalorder %s16, 0
    %p147 = por %p145, %p146
    %p148 = scmp.ne.s32.totalorder %s134, %s135
    %p149 = scmp.eq.s32.totalorder %s17, 1
    %p150 = por %p148, %p149
    %p152 = scmp.ne.s32.totalorder %s135, %s151
    %p153 = scmp.eq.s32.totalorder %s17, 0
    %p154 = por %p152, %p153
    %p155 = scmp.le.s32.totalorder 1, %s11
    %p156 = scmp.lt.s32.totalorder %s11, 3
    %p157 = pnand %p155, %p156
    %p158 = pneg %p157
    // Predicated region
    $region9: #{transformer_forward.11} parent=5 // pred_check
      _
    $region10: #{transformer_forward.11} parent=5 // pred_check_branch
      %160 = sbr.rel (%p157) target = $region12
    $region11: #{transformer_forward.11} parent=5 // pred_region
      %s161 = ssub.s32 %s11, 1
      // Predicated region
      $region13: #{transformer_forward.11} parent=11 // pred_check
        %p162 = pneg %p58
      $region14: #{transformer_forward.11} parent=11 // pred_check_branch
        %164 = sbr.rel (%p162) target = $region16
      $region15: #{transformer_forward.11} parent=11 // pred_region
        _
      $region16: #{transformer_forward.11} parent=11 // pred_fallthru
        _
      // Predicated region
      $region17: #{transformer_forward.11} parent=11 // pred_check
        %p165 = pneg %p79
      $region18: #{transformer_forward.11} parent=11 // pred_check_branch
        %167 = sbr.rel (%p165) target = $region20
      $region19: #{transformer_forward.11} parent=11 // pred_region
        _
      $region20: #{transformer_forward.11} parent=11 // pred_fallthru
        _
      // Predicated region
      $region21: #{transformer_forward.11} parent=11 // pred_check
        %p168 = pneg %p100
      $region22: #{transformer_forward.11} parent=11 // pred_check_branch
        %170 = sbr.rel (%p168) target = $region24
      $region23: #{transformer_forward.11} parent=11 // pred_region
        _
      $region24: #{transformer_forward.11} parent=11 // pred_fallthru
        _
      // Predicated region
      $region25: #{transformer_forward.11} parent=11 // pred_check
        %p171 = pneg %p121
      $region26: #{transformer_forward.11} parent=11 // pred_check_branch
        %173 = sbr.rel (%p171) target = $region28
      $region27: #{transformer_forward.11} parent=11 // pred_region
        _
      $region28: #{transformer_forward.11} parent=11 // pred_fallthru
        _
    $region12: #{transformer_forward.11} parent=5 // pred_fallthru
      _
    %p174 = scmp.lt.s32.totalorder %s11, 2
    // Predicated region
    $region29: #{transformer_forward.11} parent=5 // pred_check
      %p175 = pneg %p174
    $region30: #{transformer_forward.11} parent=5 // pred_check_branch
      %177 = sbr.rel (%p175) target = $region32
    $region31: #{transformer_forward.11} parent=5 // pred_region
      // Predicated region
      $region33: #{transformer_forward.11} parent=31 // pred_check
        %p178 = pneg %p31
      $region34: #{transformer_forward.11} parent=31 // pred_check_branch
        %180 = sbr.rel (%p178) target = $region36
      $region35: #{transformer_forward.11} parent=31 // pred_region
        %p181 = scmp.lt.s32.totalorder %s11, 1
        %s182 = scalar_select %p181, %s11, 1
        %s183 = smul.addr %s182, 2
        %s184 = smul.addr %s183, 4
        %s185 = scalar_lea.vmem %s0, %s184
      $region36: #{transformer_forward.11} parent=31 // pred_fallthru
        _
    $region32: #{transformer_forward.11} parent=5 // pred_fallthru
      _
    %p186 = scmp.le.s32.totalorder 1, %s11
    %p187 = scmp.lt.s32.totalorder %s11, 3
    %p188 = pnand %p186, %p187
    %p189 = pneg %p188
    // Predicated region
    $region37: #{transformer_forward.11} parent=5 // pred_check
      _
    $region38: #{transformer_forward.11} parent=5 // pred_check_branch
      %191 = sbr.rel (%p188) target = $region40
    $region39: #{transformer_forward.11} parent=5 // pred_region
      %s192 = ssub.s32 %s11, 1
      %p193 = scmp.lt.s32.totalorder %s16, 1
      %s194 = scalar_select %p193, %s16, 1
      %s195 = smul.addr %s194, 2
      %s196 = smul.addr %s195, 4
      %s197 = scalar_lea.vmem %s0, %s196
      %p198 = pneg %p37
      %p199 = pneg %p34
      %p200 = pneg %p58
      %p201 = pneg %p55
      %p202 = pneg %p79
      %p203 = pneg %p76
      %p204 = pneg %p100
      %p205 = pneg %p97
      %p206 = pneg %p121
      %p207 = pneg %p118
      %p208 = pneg %p147
      %p209 = pneg %p144
      %p210 = scmp.lt.s32.totalorder %s16, 1
      %s211 = scalar_select %p210, %s16, 1
      %s212 = smul.addr %s211, 2
      %s213 = smul.addr %s212, 8
      %s214 = scalar_lea.vmem %s5, %s213
      %p215 = scmp.lt.s32.totalorder %s16, 1
      %s216 = scalar_select %p215, %s16, 1
      %s217 = smul.addr %s216, 2
      %s218 = smul.addr %s217, 4
      %s219 = scalar_lea.vmem %s0, %s218
      %p220 = scmp.lt.s32.totalorder %s16, 1
      %s221 = scalar_select %p220, %s16, 1
      %s222 = smul.addr %s221, 2
      %s223 = smul.addr %s222, 8
      %s224 = scalar_lea.vmem %s5, %s223
      %v226 = vld [vmem:[%s219] sm:$0xf]
      %v227 = vld [vmem:[%s219 + $0x4] sm:$0xf]
      %v228 = vunpack.c.l.bf16 %v226
      %v229 = vunpack.c.l.bf16 %v227
      %v230 = vld [vmem:[%s1] sm:$0x1]
      %v231 = vld [vmem:[%s2] sm:$0x1]
      %vm232 = vcmask 261120
      %v233 = vsel %vm232, %v228, 0.0
      %234 = vadd.xlane.f32.xlu0 %v233
      %v235 = vpop.xlane.xlu0 %234
      %v236 = vsel %vm232, %v229, 0.0
      %237 = vadd.xlane.f32.xlu0 %v236
      %v238 = vpop.xlane.xlu0 %237
      %v239 = vrcp.pop 32.0
      %v240 = vmul.f32 %v235, %v239
      %v241 = vmul.f32 %v238, %v239
      %v242 = vsub.f32 %v228, %v240
      %v243 = vsub.f32 %v229, %v241
      %v244 = vmul.f32 %v242, %v242
      %v245 = vmul.f32 %v243, %v243
      %v246 = vsel %vm232, %v244, 0.0
      %247 = vadd.xlane.f32.xlu0 %v246
      %v248 = vpop.xlane.xlu0 %247
      %v249 = vsel %vm232, %v245, 0.0
      %250 = vadd.xlane.f32.xlu0 %v249
      %v251 = vpop.xlane.xlu0 %250
      %v252 = vmul.f32 %v248, %v239
      %v253 = vmul.f32 %v251, %v239
      %v254 = vadd.f32 %v252, 1e-05
      %v255 = vadd.f32 %v253, 1e-05
      %v256 = vrsqrt.pop %v254
      %v257 = vrsqrt.pop %v255
      %v258 = vmul.f32 %v242, %v256
      %v259 = vmul.f32 %v243, %v257
      %v261 = vlaneseq
      %v262 = vshrl.u32 %v261, 7
      %v263 = vsub.s32 0, %v262
      %v264 = vrot.slane %v230, %v263
      %v266 = vmul.f32 %v258, %v264
      %v267 = vmul.f32 %v259, %v264
      %v269 = vlaneseq
      %v270 = vshrl.u32 %v269, 7
      %v271 = vsub.s32 0, %v270
      %v272 = vrot.slane %v231, %v271
      %v274 = vadd.f32 %v266, %v272
      %v275 = vadd.f32 %v267, %v272
      %v276 = vpack.c.bf16 %v275, %v274
      %v277 = vld [vmem:[%s3] sm:$0xf]
      %v278 = vld [vmem:[%s3 + $0x4] sm:$0xf]
      %v279 = vld [vmem:[%s3 + $0x8] sm:$0xf]
      %v280 = vld [vmem:[%s3 + $0xc] sm:$0xf]
      %v281 = vld [vmem:[%s4] sm:$0x1]
      %v283 = vlaneseq
      %v284 = vshrl.u32 %v283, 7
      %v285 = vsub.s32 0, %v284
      %v286 = vrot.slane %v281, %v285
      %v292 = vunpack.c.l.b16 %v277
      %v293 = vunpack.c.l.b16 %v278
      %v294 = vunpack.c.l.b16 %v279
      %v295 = vunpack.c.l.b16 %v280
      %v296 = vpack.c.b16 %v293, %v292
      %v297 = vpack.c.b16 %v295, %v294
      %v301 = vsel %vm232, %v276, 0
      %303 = vmatprep.subr.bf16.mxu0 0
      %304 = vmatpush1.bf16.msra.mxu0 0
      %305 = vmatprep.subr.bf16.mxu0 0
      %306 = vmatpush1.bf16.msra.mxu0 0
      %307 = vmatprep.subr.bf16.mxu0 0
      %308 = vmatpush1.bf16.msra.mxu0 0
      %309 = vmatprep.subr.bf16.mxu0 0
      %310 = vmatpush1.bf16.msra.mxu0 0
      %311 = vmatprep.subr.bf16.mxu0 0
      %312 = vmatpush1.bf16.msra.mxu0 0
      %313 = vmatprep.subr.bf16.mxu0 0
      %314 = vmatpush1.bf16.msra.mxu0 0
      %315 = vmatprep.subr.bf16.mxu0 0
      %316 = vmatpush1.bf16.msra.mxu0 %v297
      %317 = vmatprep.subr.bf16.mxu0 0
      %318 = vmatpush1.bf16.msra.mxu0 %v296
      %319 = vmatprep.subr.bf16.mxu0 0
      %320 = vmatpush2.bf16.msra.mxu0 0
      %321 = vmatprep.subr.bf16.mxu0 0
      %322 = vmatpush2.bf16.msra.mxu0 0
      %323 = vmatprep.subr.bf16.mxu0 0
      %324 = vmatpush2.bf16.msra.mxu0 0
      %325 = vmatprep.subr.bf16.mxu0 0
      %326 = vmatpush2.bf16.msra.mxu0 0
      %327 = vmatprep.subr.bf16.mxu0 0
      %328 = vmatpush2.bf16.msra.mxu0 0
      %329 = vmatprep.subr.bf16.mxu0 0
      %330 = vmatpush2.bf16.msra.mxu0 0
      %331 = vmatprep.subr.bf16.mxu0 0
      %332 = vmatpush2.bf16.msra.mxu0 0
      %333 = vmatprep.subr.bf16.mxu0 0
      %334 = vmatpush2.bf16.msra.mxu0 0
      %335 = vmatprep.mubr.bf16.mxu0 0
      %336 = vmatmul.mubr.bf16.gmra.mxu0 %v301
      %v337 = vpop.f32.mrf.mxu0
      %v338 = vadd.f32 %v286, %v337
      %v339 = vpop.f32.mrf.mxu0
      %v340 = vpop.f32.mrf.mxu0
      %v341 = vadd.f32 %v286, %v340
      %v342 = vpop.f32.mrf.mxu0
      %343 = vdwg.mxu0
      %344 = vst [vmem:[%s224] sm:$0xff] %v338
      %345 = vst [vmem:[%s224 + $0x8] sm:$0xff] %v341
      %p346 = scmp.lt.s32.totalorder %s16, 1
      %s347 = scalar_select %p346, %s16, 1
      %s348 = smul.addr %s347, 2
      %s349 = smul.addr %s348, 8
      %s350 = scalar_lea.vmem %s5, %s349
      // Predicated region
      $region41: #{transformer_forward.11} parent=39 // pred_check
        %p351 = pneg %p144
      $region42: #{transformer_forward.11} parent=39 // pred_check_branch
        %353 = sbr.rel (%p351) target = $region44
      $region43: #{transformer_forward.11} parent=39 // pred_region
        _
      $region44: #{transformer_forward.11} parent=39 // pred_fallthru
        _
    $region40: #{transformer_forward.11} parent=5 // pred_fallthru
      _
    %p354 = scmp.le.s32.totalorder 2, %s11
    // Predicated region
    $region45: #{transformer_forward.11} parent=5 // pred_check
      %p355 = pneg %p354
    $region46: #{transformer_forward.11} parent=5 // pred_check_branch
      %357 = sbr.rel (%p355) target = $region48
    $region47: #{transformer_forward.11} parent=5 // pred_region
      %s358 = ssub.s32 %s11, 2
      // Predicated region
      $region49: #{transformer_forward.11} parent=47 // pred_check
        %p359 = pneg %p150
      $region50: #{transformer_forward.11} parent=47 // pred_check_branch
        %361 = sbr.rel (%p359) target = $region52
      $region51: #{transformer_forward.11} parent=47 // pred_region
        %p362 = scmp.lt.s32.totalorder %s17, 1
        %s363 = scalar_select %p362, %s17, 1
        %s364 = smul.addr %s363, 2
        %s365 = smul.addr %s364, 8
        %s366 = scalar_lea.vmem %s5, %s365
      $region52: #{transformer_forward.11} parent=47 // pred_fallthru
        _
    $region48: #{transformer_forward.11} parent=5 // pred_fallthru
      _
  $region6: #{transformer_forward.11} parent=0 // loop_footer
    %s15 = sadd.s32 1, %s11
  $region7: #{transformer_forward.11} parent=0 // loop_footer_branch
    %10 = sbr.rel target = $region3
  $region8: #{transformer_forward.11} parent=0 // loop_exit
    _

// kernel: transformer_forward.7
$region0: #{transformer_forward.7}
  #allocation0 [shape = 'u32[]', space=smem, size = 0x4, offset = 0x4, fixed_abs, tag = 'smem constant byte address 0x4 - core index']
  #allocation1 [shape = 'u32[144,128]{1,0:T(1,128)}', space=vmem, size = 0x12000, scoped, tag = 'internal scratch']
  %s0 = inlined_call_operand.vmem [shape: bf16[2,16,32], index: 0, kind: input, shape index: {}]
  %s1 = inlined_call_operand.vmem [shape: f32[1,32], index: 1, kind: input, shape index: {}]
  %s2 = inlined_call_operand.vmem [shape: f32[1,32], index: 2, kind: input, shape index: {}]
  %s3 = inlined_call_operand.vmem [shape: bf16[32,96], index: 3, kind: input, shape index: {}]
  %s4 = inlined_call_operand.vmem [shape: f32[1,96], index: 4, kind: input, shape index: {}]
  %s5 = inlined_call_operand.vmem [shape: bf16[32,32], index: 5, kind: input, shape index: {}]
  %s6 = inlined_call_operand.vmem [shape: f32[1,32], index: 6, kind: input, shape index: {}]
  %s7 = inlined_call_operand.vmem [shape: bf16[2,16,32], index: 7, kind: output, shape index: {}]
  %s8 = sld [smem:[#allocation0]]
  $region61: #{transformer_forward.7} parent=0
    _
  %s10 = ssub.s32 1, %s8
  %s11 = scalar_select 0, %s10, %s8
  loop: start=0, step=1, limit=4
  $region2: #{transformer_forward.7} parent=0 // loop_pre_header
    _
  $region3: #{transformer_forward.7} parent=0 // loop_header
    %s13 = sphi 0, %s17
    %p14 = scmp.ge.s32.totalorder %s13, 4
    %s23 = sphi 0, %s25
    %s26 = sphi 0, %s23
    %s27 = sphi 0, %s26
    %s43 = sphi 0, %s27
    %s47 = sphi 0, %s47
    %s49 = sphi 0, %s47
    %s50 = sphi 0, %s49
    %s64 = sphi 0, %s50
    %s68 = sphi 0, %s68
    %s70 = sphi 0, %s68
    %s71 = sphi 0, %s70
    %s85 = sphi 0, %s71
    %s89 = sphi 0, %s89
    %s91 = sphi 0, %s89
    %s92 = sphi 0, %s91
    %s106 = sphi 0, %s92
    %s110 = sphi 0, %s110
    %s112 = sphi 0, %s110
    %s113 = sphi 0, %s112
    %s127 = sphi 0, %s113
    %s131 = sphi 0, %s131
    %s133 = sphi 0, %s131
    %s134 = sphi 0, %s133
    %s148 = sphi 0, %s134
    %s152 = sphi 0, %s152
    %s154 = sphi 0, %s152
    %s155 = sphi 0, %s154
    %s169 = sphi 0, %s155
    %s175 = sphi 0, %s177
    %s178 = sphi 0, %s175
    %s179 = sphi 0, %s178
    %s195 = sphi 0, %s179
  $region4: #{transformer_forward.7} parent=0 // loop_header_branch
    %16 = sbr.rel (%p14) target = $region8
  $region5: #{transformer_forward.7} parent=0 // loop_body
    %s18 = ssub.s32 %s13, 1
    %s19 = ssub.s32 %s13, 2
    %s20 = sadd.s32 %s13, 1
    %s21 = ssub.s32 %s13, %s20
    %p22 = scmp.eq.s32.totalorder %s21, 0
    %s24 = sadd.s32 %s23, 1
    %s25 = scalar_select %p22, %s23, %s24
    %p28 = pneg %p22
    %p29 = scmp.eq.s32.totalorder %s13, 1
    %p30 = por %p28, %p29
    %p31 = scmp.ne.s32.totalorder %s23, %s26
    %p32 = scmp.eq.s32.totalorder %s13, 0
    %p33 = por %p31, %p32
    %p34 = scmp.ne.s32.totalorder %s23, %s26
    %p35 = scmp.eq.s32.totalorder %s18, 1
    %p36 = por %p34, %p35
    %p37 = scmp.ne.s32.totalorder %s26, %s27
    %p38 = scmp.eq.s32.totalorder %s18, 0
    %p39 = por %p37, %p38
    %p40 = scmp.ne.s32.totalorder %s26, %s27
    %p41 = scmp.eq.s32.totalorder %s19, 1
    %p42 = por %p40, %p41
    %p44 = scmp.ne.s32.totalorder %s27, %s43
    %p45 = scmp.eq.s32.totalorder %s19, 0
    %p46 = por %p44, %p45
    %s48 = sadd.s32 %s47, 1
    %p51 = scmp.eq.s32.totalorder %s13, 1
    %p52 = scmp.ne.s32.totalorder %s47, %s49
    %p53 = scmp.eq.s32.totalorder %s13, 0
    %p54 = por %p52, %p53
    %p55 = scmp.ne.s32.totalorder %s47, %s49
    %p56 = scmp.eq.s32.totalorder %s18, 1
    %p57 = por %p55, %p56
    %p58 = scmp.ne.s32.totalorder %s49, %s50
    %p59 = scmp.eq.s32.totalorder %s18, 0
    %p60 = por %p58, %p59
    %p61 = scmp.ne.s32.totalorder %s49, %s50
    %p62 = scmp.eq.s32.totalorder %s19, 1
    %p63 = por %p61, %p62
    %p65 = scmp.ne.s32.totalorder %s50, %s64
    %p66 = scmp.eq.s32.totalorder %s19, 0
    %p67 = por %p65, %p66
    %s69 = sadd.s32 %s68, 1
    %p72 = scmp.eq.s32.totalorder %s13, 1
    %p73 = scmp.ne.s32.totalorder %s68, %s70
    %p74 = scmp.eq.s32.totalorder %s13, 0
    %p75 = por %p73, %p74
    %p76 = scmp.ne.s32.totalorder %s68, %s70
    %p77 = scmp.eq.s32.totalorder %s18, 1
    %p78 = por %p76, %p77
    %p79 = scmp.ne.s32.totalorder %s70, %s71
    %p80 = scmp.eq.s32.totalorder %s18, 0
    %p81 = por %p79, %p80
    %p82 = scmp.ne.s32.totalorder %s70, %s71
    %p83 = scmp.eq.s32.totalorder %s19, 1
    %p84 = por %p82, %p83
    %p86 = scmp.ne.s32.totalorder %s71, %s85
    %p87 = scmp.eq.s32.totalorder %s19, 0
    %p88 = por %p86, %p87
    %s90 = sadd.s32 %s89, 1
    %p93 = scmp.eq.s32.totalorder %s13, 1
    %p94 = scmp.ne.s32.totalorder %s89, %s91
    %p95 = scmp.eq.s32.totalorder %s13, 0
    %p96 = por %p94, %p95
    %p97 = scmp.ne.s32.totalorder %s89, %s91
    %p98 = scmp.eq.s32.totalorder %s18, 1
    %p99 = por %p97, %p98
    %p100 = scmp.ne.s32.totalorder %s91, %s92
    %p101 = scmp.eq.s32.totalorder %s18, 0
    %p102 = por %p100, %p101
    %p103 = scmp.ne.s32.totalorder %s91, %s92
    %p104 = scmp.eq.s32.totalorder %s19, 1
    %p105 = por %p103, %p104
    %p107 = scmp.ne.s32.totalorder %s92, %s106
    %p108 = scmp.eq.s32.totalorder %s19, 0
    %p109 = por %p107, %p108
    %s111 = sadd.s32 %s110, 1
    %p114 = scmp.eq.s32.totalorder %s13, 1
    %p115 = scmp.ne.s32.totalorder %s110, %s112
    %p116 = scmp.eq.s32.totalorder %s13, 0
    %p117 = por %p115, %p116
    %p118 = scmp.ne.s32.totalorder %s110, %s112
    %p119 = scmp.eq.s32.totalorder %s18, 1
    %p120 = por %p118, %p119
    %p121 = scmp.ne.s32.totalorder %s112, %s113
    %p122 = scmp.eq.s32.totalorder %s18, 0
    %p123 = por %p121, %p122
    %p124 = scmp.ne.s32.totalorder %s112, %s113
    %p125 = scmp.eq.s32.totalorder %s19, 1
    %p126 = por %p124, %p125
    %p128 = scmp.ne.s32.totalorder %s113, %s127
    %p129 = scmp.eq.s32.totalorder %s19, 0
    %p130 = por %p128, %p129
    %s132 = sadd.s32 %s131, 1
    %p135 = scmp.eq.s32.totalorder %s13, 1
    %p136 = scmp.ne.s32.totalorder %s131, %s133
    %p137 = scmp.eq.s32.totalorder %s13, 0
    %p138 = por %p136, %p137
    %p139 = scmp.ne.s32.totalorder %s131, %s133
    %p140 = scmp.eq.s32.totalorder %s18, 1
    %p141 = por %p139, %p140
    %p142 = scmp.ne.s32.totalorder %s133, %s134
    %p143 = scmp.eq.s32.totalorder %s18, 0
    %p144 = por %p142, %p143
    %p145 = scmp.ne.s32.totalorder %s133, %s134
    %p146 = scmp.eq.s32.totalorder %s19, 1
    %p147 = por %p145, %p146
    %p149 = scmp.ne.s32.totalorder %s134, %s148
    %p150 = scmp.eq.s32.totalorder %s19, 0
    %p151 = por %p149, %p150
    %s153 = sadd.s32 %s152, 1
    %p156 = scmp.eq.s32.totalorder %s13, 1
    %p157 = scmp.ne.s32.totalorder %s152, %s154
    %p158 = scmp.eq.s32.totalorder %s13, 0
    %p159 = por %p157, %p158
    %p160 = scmp.ne.s32.totalorder %s152, %s154
    %p161 = scmp.eq.s32.totalorder %s18, 1
    %p162 = por %p160, %p161
    %p163 = scmp.ne.s32.totalorder %s154, %s155
    %p164 = scmp.eq.s32.totalorder %s18, 0
    %p165 = por %p163, %p164
    %p166 = scmp.ne.s32.totalorder %s154, %s155
    %p167 = scmp.eq.s32.totalorder %s19, 1
    %p168 = por %p166, %p167
    %p170 = scmp.ne.s32.totalorder %s155, %s169
    %p171 = scmp.eq.s32.totalorder %s19, 0
    %p172 = por %p170, %p171
    %s173 = ssub.s32 %s13, %s20
    %p174 = scmp.eq.s32.totalorder %s173, 0
    %s176 = sadd.s32 %s175, 1
    %s177 = scalar_select %p174, %s175, %s176
    %p180 = pneg %p174
    %p181 = scmp.eq.s32.totalorder %s13, 1
    %p182 = por %p180, %p181
    %p183 = scmp.ne.s32.totalorder %s175, %s178
    %p184 = scmp.eq.s32.totalorder %s13, 0
    %p185 = por %p183, %p184
    %p186 = scmp.ne.s32.totalorder %s175, %s178
    %p187 = scmp.eq.s32.totalorder %s18, 1
    %p188 = por %p186, %p187
    %p189 = scmp.ne.s32.totalorder %s178, %s179
    %p190 = scmp.eq.s32.totalorder %s18, 0
    %p191 = por %p189, %p190
    %p192 = scmp.ne.s32.totalorder %s178, %s179
    %p193 = scmp.eq.s32.totalorder %s19, 1
    %p194 = por %p192, %p193
    %p196 = scmp.ne.s32.totalorder %s179, %s195
    %p197 = scmp.eq.s32.totalorder %s19, 0
    %p198 = por %p196, %p197
    %p199 = scmp.le.s32.totalorder 1, %s13
    %p200 = scmp.lt.s32.totalorder %s13, 3
    %p201 = pnand %p199, %p200
    %p202 = pneg %p201
    // Predicated region
    $region9: #{transformer_forward.7} parent=5 // pred_check
      _
    $region10: #{transformer_forward.7} parent=5 // pred_check_branch
      %204 = sbr.rel (%p201) target = $region12
    $region11: #{transformer_forward.7} parent=5 // pred_region
      %s205 = ssub.s32 %s13, 1
      // Predicated region
      $region13: #{transformer_forward.7} parent=11 // pred_check
        %p206 = pneg %p60
      $region14: #{transformer_forward.7} parent=11 // pred_check_branch
        %208 = sbr.rel (%p206) target = $region16
      $region15: #{transformer_forward.7} parent=11 // pred_region
        _
      $region16: #{transformer_forward.7} parent=11 // pred_fallthru
        _
      // Predicated region
      $region17: #{transformer_forward.7} parent=11 // pred_check
        %p209 = pneg %p81
      $region18: #{transformer_forward.7} parent=11 // pred_check_branch
        %211 = sbr.rel (%p209) target = $region20
      $region19: #{transformer_forward.7} parent=11 // pred_region
        _
      $region20: #{transformer_forward.7} parent=11 // pred_fallthru
        _
      // Predicated region
      $region21: #{transformer_forward.7} parent=11 // pred_check
        %p212 = pneg %p102
      $region22: #{transformer_forward.7} parent=11 // pred_check_branch
        %214 = sbr.rel (%p212) target = $region24
      $region23: #{transformer_forward.7} parent=11 // pred_region
        _
      $region24: #{transformer_forward.7} parent=11 // pred_fallthru
        _
      // Predicated region
      $region25: #{transformer_forward.7} parent=11 // pred_check
        %p215 = pneg %p123
      $region26: #{transformer_forward.7} parent=11 // pred_check_branch
        %217 = sbr.rel (%p215) target = $region28
      $region27: #{transformer_forward.7} parent=11 // pred_region
        _
      $region28: #{transformer_forward.7} parent=11 // pred_fallthru
        _
      // Predicated region
      $region29: #{transformer_forward.7} parent=11 // pred_check
        %p218 = pneg %p144
      $region30: #{transformer_forward.7} parent=11 // pred_check_branch
        %220 = sbr.rel (%p218) target = $region32
      $region31: #{transformer_forward.7} parent=11 // pred_region
        _
      $region32: #{transformer_forward.7} parent=11 // pred_fallthru
        _
      // Predicated region
      $region33: #{transformer_forward.7} parent=11 // pred_check
        %p221 = pneg %p165
      $region34: #{transformer_forward.7} parent=11 // pred_check_branch
        %223 = sbr.rel (%p221) target = $region36
      $region35: #{transformer_forward.7} parent=11 // pred_region
        _
      $region36: #{transformer_forward.7} parent=11 // pred_fallthru
        _
    $region12: #{transformer_forward.7} parent=5 // pred_fallthru
      _
    %p224 = scmp.lt.s32.totalorder %s13, 2
    // Predicated region
    $region37: #{transformer_forward.7} parent=5 // pred_check
      %p225 = pneg %p224
    $region38: #{transformer_forward.7} parent=5 // pred_check_branch
      %227 = sbr.rel (%p225) target = $region40
    $region39: #{transformer_forward.7} parent=5 // pred_region
      // Predicated region
      $region41: #{transformer_forward.7} parent=39 // pred_check
        %p228 = pneg %p33
      $region42: #{transformer_forward.7} parent=39 // pred_check_branch
        %230 = sbr.rel (%p228) target = $region44
      $region43: #{transformer_forward.7} parent=39 // pred_region
        %p231 = scmp.lt.s32.totalorder %s13, 1
        %s232 = scalar_select %p231, %s13, 1
        %s233 = smul.addr %s232, 2
        %s234 = smul.addr %s233, 4
        %s235 = scalar_lea.vmem %s0, %s234
      $region44: #{transformer_forward.7} parent=39 // pred_fallthru
        _
    $region40: #{transformer_forward.7} parent=5 // pred_fallthru
      _
    %p236 = scmp.le.s32.totalorder 1, %s13
    %p237 = scmp.lt.s32.totalorder %s13, 3
    %p238 = pnand %p236, %p237
    %p239 = pneg %p238
    // Predicated region
    $region45: #{transformer_forward.7} parent=5 // pred_check
      _
    $region46: #{transformer_forward.7} parent=5 // pred_check_branch
      %241 = sbr.rel (%p238) target = $region48
    $region47: #{transformer_forward.7} parent=5 // pred_region
      %s242 = ssub.s32 %s13, 1
      %p243 = scmp.lt.s32.totalorder %s18, 1
      %s244 = scalar_select %p243, %s18, 1
      %s245 = smul.addr %s244, 2
      %s246 = smul.addr %s245, 4
      %s247 = scalar_lea.vmem %s0, %s246
      %p248 = pneg %p39
      %p249 = pneg %p36
      %p250 = pneg %p60
      %p251 = pneg %p57
      %p252 = pneg %p81
      %p253 = pneg %p78
      %p254 = pneg %p102
      %p255 = pneg %p99
      %p256 = pneg %p123
      %p257 = pneg %p120
      %p258 = pneg %p144
      %p259 = pneg %p141
      %p260 = pneg %p165
      %p261 = pneg %p162
      %p262 = pneg %p191
      %p263 = pneg %p188
      %p264 = scmp.lt.s32.totalorder %s18, 1
      %s265 = scalar_select %p264, %s18, 1
      %s266 = smul.addr %s265, 2
      %s267 = smul.addr %s266, 4
      %s268 = scalar_lea.vmem %s7, %s267
      %p269 = scmp.lt.s32.totalorder %s18, 1
      %s270 = scalar_select %p269, %s18, 1
      %s271 = smul.addr %s270, 2
      %s272 = smul.addr %s271, 4
      %s273 = scalar_lea.vmem %s0, %s272
      %p274 = scmp.lt.s32.totalorder %s18, 1
      %s275 = scalar_select %p274, %s18, 1
      %s276 = smul.addr %s275, 2
      %s277 = smul.addr %s276, 4
      %s278 = scalar_lea.vmem %s7, %s277
      %v280 = vld [vmem:[%s273] sm:$0xf]
      %v281 = vld [vmem:[%s273 + $0x4] sm:$0xf]
      %v282 = vunpack.c.l.bf16 %v280
      %v283 = vunpack.c.l.bf16 %v281
      %v284 = vld [vmem:[%s1] sm:$0x1]
      %v285 = vld [vmem:[%s2] sm:$0x1]
      %vm286 = vcmask 261120
      %v287 = vsel %vm286, %v282, 0.0
      %288 = vadd.xlane.f32.xlu0 %v287
      %v289 = vpop.xlane.xlu0 %288
      %v290 = vsel %vm286, %v283, 0.0
      %291 = vadd.xlane.f32.xlu0 %v290
      %v292 = vpop.xlane.xlu0 %291
      %v293 = vrcp.pop 32.0
      %v294 = vmul.f32 %v289, %v293
      %v295 = vmul.f32 %v292, %v293
      %v296 = vsub.f32 %v282, %v294
      %v297 = vsub.f32 %v283, %v295
      %v298 = vmul.f32 %v296, %v296
      %v299 = vmul.f32 %v297, %v297
      %v300 = vsel %vm286, %v298, 0.0
      %301 = vadd.xlane.f32.xlu0 %v300
      %v302 = vpop.xlane.xlu0 %301
      %v303 = vsel %vm286, %v299, 0.0
      %304 = vadd.xlane.f32.xlu0 %v303
      %v305 = vpop.xlane.xlu0 %304
      %v306 = vmul.f32 %v302, %v293
      %v307 = vmul.f32 %v305, %v293
      %v308 = vadd.f32 %v306, 1e-05
      %v309 = vadd.f32 %v307, 1e-05
      %v310 = vrsqrt.pop %v308
      %v311 = vrsqrt.pop %v309
      %v312 = vmul.f32 %v296, %v310
      %v313 = vmul.f32 %v297, %v311
      %v315 = vlaneseq
      %v316 = vshrl.u32 %v315, 7
      %v317 = vsub.s32 0, %v316
      %v318 = vrot.slane %v284, %v317
      %v320 = vmul.f32 %v312, %v318
      %v321 = vmul.f32 %v313, %v318
      %v323 = vlaneseq
      %v324 = vshrl.u32 %v323, 7
      %v325 = vsub.s32 0, %v324
      %v326 = vrot.slane %v285, %v325
      %v328 = vadd.f32 %v320, %v326
      %v329 = vadd.f32 %v321, %v326
      %v330 = vpack.c.bf16 %v329, %v328
      %v331 = vld [vmem:[%s3] sm:$0xf]
      %v332 = vld [vmem:[%s3 + $0x4] sm:$0xf]
      %v333 = vld [vmem:[%s3 + $0x8] sm:$0xf]
      %v334 = vld [vmem:[%s3 + $0xc] sm:$0xf]
      %v335 = vld [vmem:[%s4] sm:$0x1]
      %v337 = vlaneseq
      %v338 = vshrl.u32 %v337, 7
      %v339 = vsub.s32 0, %v338
      %v340 = vrot.slane %v335, %v339
      %v346 = vunpack.c.l.b16 %v331
      %v347 = vunpack.c.l.b16 %v332
      %v348 = vunpack.c.l.b16 %v333
      %v349 = vunpack.c.l.b16 %v334
      %v350 = vpack.c.b16 %v347, %v346
      %v351 = vpack.c.b16 %v349, %v348
      %v355 = vsel %vm286, %v330, 0
      %357 = vmatprep.subr.bf16.mxu0 0
      %358 = vmatpush1.bf16.msra.mxu0 0
      %359 = vmatprep.subr.bf16.mxu0 0
      %360 = vmatpush1.bf16.msra.mxu0 0
      %361 = vmatprep.subr.bf16.mxu0 0
      %362 = vmatpush1.bf16.msra.mxu0 0
      %363 = vmatprep.subr.bf16.mxu0 0
      %364 = vmatpush1.bf16.msra.mxu0 0
      %365 = vmatprep.subr.bf16.mxu0 0
      %366 = vmatpush1.bf16.msra.mxu0 0
      %367 = vmatprep.subr.bf16.mxu0 0
      %368 = vmatpush1.bf16.msra.mxu0 0
      %369 = vmatprep.subr.bf16.mxu0 0
      %370 = vmatpush1.bf16.msra.mxu0 %v351
      %371 = vmatprep.subr.bf16.mxu0 0
      %372 = vmatpush1.bf16.msra.mxu0 %v350
      %373 = vmatprep.subr.bf16.mxu0 0
      %374 = vmatpush2.bf16.msra.mxu0 0
      %375 = vmatprep.subr.bf16.mxu0 0
      %376 = vmatpush2.bf16.msra.mxu0 0
      %377 = vmatprep.subr.bf16.mxu0 0
      %378 = vmatpush2.bf16.msra.mxu0 0
      %379 = vmatprep.subr.bf16.mxu0 0
      %380 = vmatpush2.bf16.msra.mxu0 0
      %381 = vmatprep.subr.bf16.mxu0 0
      %382 = vmatpush2.bf16.msra.mxu0 0
      %383 = vmatprep.subr.bf16.mxu0 0
      %384 = vmatpush2.bf16.msra.mxu0 0
      %385 = vmatprep.subr.bf16.mxu0 0
      %386 = vmatpush2.bf16.msra.mxu0 0
      %387 = vmatprep.subr.bf16.mxu0 0
      %388 = vmatpush2.bf16.msra.mxu0 0
      %389 = vmatprep.mubr.bf16.mxu0 0
      %390 = vmatmul.mubr.bf16.gmra.mxu0 %v355
      %v391 = vpop.f32.mrf.mxu0
      %v392 = vadd.f32 %v340, %v391
      %v393 = vpop.f32.mrf.mxu0
      %v394 = vpop.f32.mrf.mxu0
      %v395 = vadd.f32 %v340, %v394
      %v396 = vpop.f32.mrf.mxu0
      %397 = vdwg.mxu0
      %v398 = vpack.c.bf16 %v395, %v392
      %v399 = vlaneseq
      %v400 = vshrl.u32 %v399, 7
      %v401 = vadd.s32 %v400, 8
      %v402 = vlaneseq
      %v403 = vand.u32 %v402, 127
      %vm404 = vcmp.le.s32.totalorder %v403, %v400
      %vm405 = vcmp.le.s32.totalorder %v403, %v401
      %407 = vrot.lane.b32.xlu0 %v398, 96
      %v408 = vpop.permute.xlu0 %407
      %vm409 = vcmask 130048
      %v411 = vsel %vm409, %v398, 0
      %v414 = vsel %vm409, %v408, 0
      %416 = vmatprep.subr.bf16.mxu0 0
      %417 = vmatpush1.bf16.xpose.msra.mxu0 0
      %418 = vmatprep.subr.bf16.mxu0 0
      %419 = vmatpush1.bf16.xpose.msra.mxu0 0
      %420 = vmatprep.subr.bf16.mxu0 0
      %421 = vmatpush1.bf16.xpose.msra.mxu0 0
      %422 = vmatprep.subr.bf16.mxu0 0
      %423 = vmatpush1.bf16.xpose.msra.mxu0 0
      %424 = vmatprep.subr.bf16.mxu0 0
      %425 = vmatpush1.bf16.xpose.msra.mxu0 0
      %426 = vmatprep.subr.bf16.mxu0 0
      %427 = vmatpush1.bf16.xpose.msra.mxu0 0
      %428 = vmatprep.subr.bf16.mxu0 0
      %429 = vmatpush1.bf16.xpose.msra.mxu0 0
      %430 = vmatprep.subr.bf16.mxu0 0
      %431 = vmatpush1.bf16.xpose.msra.mxu0 %v414
      %432 = vmatprep.subr.bf16.mxu0 0
      %433 = vmatpush2.bf16.xpose.msra.mxu0 0
      %434 = vmatprep.subr.bf16.mxu0 0
      %435 = vmatpush2.bf16.xpose.msra.mxu0 0
      %436 = vmatprep.subr.bf16.mxu0 0
      %437 = vmatpush2.bf16.xpose.msra.mxu0 0
      %438 = vmatprep.subr.bf16.mxu0 0
      %439 = vmatpush2.bf16.xpose.msra.mxu0 0
      %440 = vmatprep.subr.bf16.mxu0 0
      %441 = vmatpush2.bf16.xpose.msra.mxu0 0
      %442 = vmatprep.subr.bf16.mxu0 0
      %443 = vmatpush2.bf16.xpose.msra.mxu0 0
      %444 = vmatprep.subr.bf16.mxu0 0
      %445 = vmatpush2.bf16.xpose.msra.mxu0 0
      %446 = vmatprep.subr.bf16.mxu0 0
      %447 = vmatpush2.bf16.xpose.msra.mxu0 0
      %448 = vmatprep.mubr.bf16.mxu0 0
      %449 = vmatmul.mubr.bf16.gmra.mxu0 %v411
      %v450 = vpop.f32.mrf.mxu0
      %v451 = vadd.f32 0.0, %v450
      %v452 = vpop.f32.mrf.mxu0
      %v453 = vpop.f32.mrf.mxu0
      %v454 = vadd.f32 0.0, %v453
      %v455 = vpop.f32.mrf.mxu0
      %456 = vdwg.mxu0
      %v457 = vmul.f32 %v451, 0.25
      %v458 = vmul.f32 %v454, 0.25
      %v459 = vsel %vm404, %v457, -1e+30
      %v460 = vsel %vm405, %v458, -1e+30
      %v461 = vsel %vm409, %v459, -inf
      %462 = vmax.xlane.f32.xlu0 %v461
      %v463 = vpop.xlane.xlu0 %462
      %v464 = vsel %vm409, %v460, -inf
      %465 = vmax.xlane.f32.xlu0 %v464
      %v466 = vpop.xlane.xlu0 %465
      %v467 = vsub.f32 %v459, %v463
      %v468 = vsub.f32 %v460, %v466
      %v469 = vmul.f32 %v467, 1.442695
      %v470 = vpow.pop %v469
      %v471 = vmul.f32 %v468, 1.442695
      %v472 = vpow.pop %v471
      %v473 = vsel %vm409, %v470, 0.0
      %474 = vadd.xlane.f32.xlu0 %v473
      %v475 = vpop.xlane.xlu0 %474
      %v476 = vsel %vm409, %v472, 0.0
      %477 = vadd.xlane.f32.xlu0 %v476
      %v478 = vpop.xlane.xlu0 %477
      %v479 = vrcp.pop %v475
      %v480 = vmul.f32 %v470, %v479
      %v481 = vrcp.pop %v478
      %v482 = vmul.f32 %v472, %v481
      %v483 = vpack.c.bf16 %v482, %v480
      %484 = vrot.lane.b32.xlu0 %v398, 64
      %v485 = vpop.permute.xlu0 %484
      %v488 = vsel %vm409, %v483, 0
      %490 = vmatprep.subr.bf16.mxu0 0
      %491 = vmatpush1.bf16.msra.mxu0 0
      %492 = vmatprep.subr.bf16.mxu0 0
      %493 = vmatpush1.bf16.msra.mxu0 0
      %494 = vmatprep.subr.bf16.mxu0 0
      %495 = vmatpush1.bf16.msra.mxu0 0
      %496 = vmatprep.subr.bf16.mxu0 0
      %497 = vmatpush1.bf16.msra.mxu0 0
      %498 = vmatprep.subr.bf16.mxu0 0
      %499 = vmatpush1.bf16.msra.mxu0 0
      %500 = vmatprep.subr.bf16.mxu0 0
      %501 = vmatpush1.bf16.msra.mxu0 0
      %502 = vmatprep.subr.bf16.mxu0 0
      %503 = vmatpush1.bf16.msra.mxu0 0
      %504 = vmatprep.subr.bf16.mxu0 0
      %505 = vmatpush1.bf16.msra.mxu0 %v485
      %506 = vmatprep.subr.bf16.mxu0 0
      %507 = vmatpush2.bf16.msra.mxu0 0
      %508 = vmatprep.subr.bf16.mxu0 0
      %509 = vmatpush2.bf16.msra.mxu0 0
      %510 = vmatprep.subr.bf16.mxu0 0
      %511 = vmatpush2.bf16.msra.mxu0 0
      %512 = vmatprep.subr.bf16.mxu0 0
      %513 = vmatpush2.bf16.msra.mxu0 0
      %514 = vmatprep.subr.bf16.mxu0 0
      %515 = vmatpush2.bf16.msra.mxu0 0
      %516 = vmatprep.subr.bf16.mxu0 0
      %517 = vmatpush2.bf16.msra.mxu0 0
      %518 = vmatprep.subr.bf16.mxu0 0
      %519 = vmatpush2.bf16.msra.mxu0 0
      %520 = vmatprep.subr.bf16.mxu0 0
      %521 = vmatpush2.bf16.msra.mxu0 0
      %522 = vmatprep.mubr.bf16.mxu0 0
      %523 = vmatmul.mubr.bf16.gmra.mxu0 %v488
      %v524 = vpop.f32.mrf.mxu0
      %v525 = vadd.f32 0.0, %v524
      %v526 = vpop.f32.mrf.mxu0
      %v527 = vpop.f32.mrf.mxu0
      %v528 = vadd.f32 0.0, %v527
      %v529 = vpop.f32.mrf.mxu0
      %530 = vdwg.mxu0
      %531 = vrot.lane.b32.xlu0 %v398, 112
      %v532 = vpop.permute.xlu0 %531
      %533 = vrot.lane.b32.xlu0 %v398, 80
      %v534 = vpop.permute.xlu0 %533
      %v536 = vsel %vm409, %v532, 0
      %v539 = vsel %vm409, %v534, 0
      %541 = vmatprep.subr.bf16.mxu0 0
      %542 = vmatpush1.bf16.xpose.msra.mxu0 0
      %543 = vmatprep.subr.bf16.mxu0 0
      %544 = vmatpush1.bf16.xpose.msra.mxu0 0
      %545 = vmatprep.subr.bf16.mxu0 0
      %546 = vmatpush1.bf16.xpose.msra.mxu0 0
      %547 = vmatprep.subr.bf16.mxu0 0
      %548 = vmatpush1.bf16.xpose.msra.mxu0 0
      %549 = vmatprep.subr.bf16.mxu0 0
      %550 = vmatpush1.bf16.xpose.msra.mxu0 0
      %551 = vmatprep.subr.bf16.mxu0 0
      %552 = vmatpush1.bf16.xpose.msra.mxu0 0
      %553 = vmatprep.subr.bf16.mxu0 0
      %554 = vmatpush1.bf16.xpose.msra.mxu0 0
      %555 = vmatprep.subr.bf16.mxu0 0
      %556 = vmatpush1.bf16.xpose.msra.mxu0 %v539
      %557 = vmatprep.subr.bf16.mxu0 0
      %558 = vmatpush2.bf16.xpose.msra.mxu0 0
      %559 = vmatprep.subr.bf16.mxu0 0
      %560 = vmatpush2.bf16.xpose.msra.mxu0 0
      %561 = vmatprep.subr.bf16.mxu0 0
      %562 = vmatpush2.bf16.xpose.msra.mxu0 0
      %563 = vmatprep.subr.bf16.mxu0 0
      %564 = vmatpush2.bf16.xpose.msra.mxu0 0
      %565 = vmatprep.subr.bf16.mxu0 0
      %566 = vmatpush2.bf16.xpose.msra.mxu0 0
      %567 = vmatprep.subr.bf16.mxu0 0
      %568 = vmatpush2.bf16.xpose.msra.mxu0 0
      %569 = vmatprep.subr.bf16.mxu0 0
      %570 = vmatpush2.bf16.xpose.msra.mxu0 0
      %571 = vmatprep.subr.bf16.mxu0 0
      %572 = vmatpush2.bf16.xpose.msra.mxu0 0
      %573 = vmatprep.mubr.bf16.mxu0 0
      %574 = vmatmul.mubr.bf16.gmra.mxu0 %v536
      %v575 = vpop.f32.mrf.mxu0
      %v576 = vadd.f32 0.0, %v575
      %v577 = vpop.f32.mrf.mxu0
      %v578 = vpop.f32.mrf.mxu0
      %v579 = vadd.f32 0.0, %v578
      %v580 = vpop.f32.mrf.mxu0
      %581 = vdwg.mxu0
      %v582 = vmul.f32 %v576, 0.25
      %v583 = vmul.f32 %v579, 0.25
      %v584 = vsel %vm404, %v582, -1e+30
      %v585 = vsel %vm405, %v583, -1e+30
      %v586 = vsel %vm409, %v584, -inf
      %587 = vmax.xlane.f32.xlu0 %v586
      %v588 = vpop.xlane.xlu0 %587
      %v589 = vsel %vm409, %v585, -inf
      %590 = vmax.xlane.f32.xlu0 %v589
      %v591 = vpop.xlane.xlu0 %590
      %v592 = vsub.f32 %v584, %v588
      %v593 = vsub.f32 %v585, %v591
      %v594 = vmul.f32 %v592, 1.442695
      %v595 = vpow.pop %v594
      %v596 = vmul.f32 %v593, 1.442695
      %v597 = vpow.pop %v596
      %v598 = vsel %vm409, %v595, 0.0
      %599 = vadd.xlane.f32.xlu0 %v598
      %v600 = vpop.xlane.xlu0 %599
      %v601 = vsel %vm409, %v597, 0.0
      %602 = vadd.xlane.f32.xlu0 %v601
      %v603 = vpop.xlane.xlu0 %602
      %v604 = vrcp.pop %v600
      %v605 = vmul.f32 %v595, %v604
      %v606 = vrcp.pop %v603
      %v607 = vmul.f32 %v597, %v606
      %v608 = vpack.c.bf16 %v607, %v605
      %609 = vrot.lane.b32.xlu0 %v398, 48
      %v610 = vpop.permute.xlu0 %609
      %v613 = vsel %vm409, %v608, 0
      %615 = vmatprep.subr.bf16.mxu0 0
      %616 = vmatpush1.bf16.msra.mxu0 0
      %617 = vmatprep.subr.bf16.mxu0 0
      %618 = vmatpush1.bf16.msra.mxu0 0
      %619 = vmatprep.subr.bf16.mxu0 0
      %620 = vmatpush1.bf16.msra.mxu0 0
      %621 = vmatprep.subr.bf16.mxu0 0
      %622 = vmatpush1.bf16.msra.mxu0 0
      %623 = vmatprep.subr.bf16.mxu0 0
      %624 = vmatpush1.bf16.msra.mxu0 0
      %625 = vmatprep.subr.bf16.mxu0 0
      %626 = vmatpush1.bf16.msra.mxu0 0
      %627 = vmatprep.subr.bf16.mxu0 0
      %628 = vmatpush1.bf16.msra.mxu0 0
      %629 = vmatprep.subr.bf16.mxu0 0
      %630 = vmatpush1.bf16.msra.mxu0 %v610
      %631 = vmatprep.subr.bf16.mxu0 0
      %632 = vmatpush2.bf16.msra.mxu0 0
      %633 = vmatprep.subr.bf16.mxu0 0
      %634 = vmatpush2.bf16.msra.mxu0 0
      %635 = vmatprep.subr.bf16.mxu0 0
      %636 = vmatpush2.bf16.msra.mxu0 0
      %637 = vmatprep.subr.bf16.mxu0 0
      %638 = vmatpush2.bf16.msra.mxu0 0
      %639 = vmatprep.subr.bf16.mxu0 0
      %640 = vmatpush2.bf16.msra.mxu0 0
      %641 = vmatprep.subr.bf16.mxu0 0
      %642 = vmatpush2.bf16.msra.mxu0 0
      %643 = vmatprep.subr.bf16.mxu0 0
      %644 = vmatpush2.bf16.msra.mxu0 0
      %645 = vmatprep.subr.bf16.mxu0 0
      %646 = vmatpush2.bf16.msra.mxu0 0
      %647 = vmatprep.mubr.bf16.mxu0 0
      %648 = vmatmul.mubr.bf16.gmra.mxu0 %v613
      %v649 = vpop.f32.mrf.mxu0
      %v650 = vadd.f32 0.0, %v649
      %v651 = vpop.f32.mrf.mxu0
      %v652 = vpop.f32.mrf.mxu0
      %v653 = vadd.f32 0.0, %v652
      %v654 = vpop.f32.mrf.mxu0
      %655 = vdwg.mxu0
      %658 = vrot.lane.b32.xlu0 %v650, 16
      %v659 = vpop.permute.xlu0 %658
      %660 = vrot.lane.b32.xlu0 %v653, 16
      %v661 = vpop.permute.xlu0 %660
      %v664 = vsel %vm409, %v525, %v659
      %v665 = vsel %vm409, %v528, %v661
      %v666 = vpack.c.bf16 %v665, %v664
      %v667 = vld [vmem:[%s5] sm:$0xf]
      %v668 = vld [vmem:[%s5 + $0x4] sm:$0xf]
      %v669 = vld [vmem:[%s5 + $0x8] sm:$0xf]
      %v670 = vld [vmem:[%s5 + $0xc] sm:$0xf]
      %v671 = vld [vmem:[%s6] sm:$0x1]
      %v673 = vlaneseq
      %v674 = vshrl.u32 %v673, 7
      %v675 = vsub.s32 0, %v674
      %v676 = vrot.slane %v671, %v675
      %v682 = vunpack.c.l.b16 %v667
      %v683 = vunpack.c.l.b16 %v668
      %v684 = vunpack.c.l.b16 %v669
      %v685 = vunpack.c.l.b16 %v670
      %v686 = vpack.c.b16 %v683, %v682
      %v687 = vpack.c.b16 %v685, %v684
      %v691 = vsel %vm286, %v666, 0
      %693 = vmatprep.subr.bf16.mxu0 0
      %694 = vmatpush1.bf16.msra.mxu0 0
      %695 = vmatprep.subr.bf16.mxu0 0
      %696 = vmatpush1.bf16.msra.mxu0 0
      %697 = vmatprep.subr.bf16.mxu0 0
      %698 = vmatpush1.bf16.msra.mxu0 0
      %699 = vmatprep.subr.bf16.mxu0 0
      %700 = vmatpush1.bf16.msra.mxu0 0
      %701 = vmatprep.subr.bf16.mxu0 0
      %702 = vmatpush1.bf16.msra.mxu0 0
      %703 = vmatprep.subr.bf16.mxu0 0
      %704 = vmatpush1.bf16.msra.mxu0 0
      %705 = vmatprep.subr.bf16.mxu0 0
      %706 = vmatpush1.bf16.msra.mxu0 %v687
      %707 = vmatprep.subr.bf16.mxu0 0
      %708 = vmatpush1.bf16.msra.mxu0 %v686
      %709 = vmatprep.subr.bf16.mxu0 0
      %710 = vmatpush2.bf16.msra.mxu0 0
      %711 = vmatprep.subr.bf16.mxu0 0
      %712 = vmatpush2.bf16.msra.mxu0 0
      %713 = vmatprep.subr.bf16.mxu0 0
      %714 = vmatpush2.bf16.msra.mxu0 0
      %715 = vmatprep.subr.bf16.mxu0 0
      %716 = vmatpush2.bf16.msra.mxu0 0
      %717 = vmatprep.subr.bf16.mxu0 0
      %718 = vmatpush2.bf16.msra.mxu0 0
      %719 = vmatprep.subr.bf16.mxu0 0
      %720 = vmatpush2.bf16.msra.mxu0 0
      %721 = vmatprep.subr.bf16.mxu0 0
      %722 = vmatpush2.bf16.msra.mxu0 0
      %723 = vmatprep.subr.bf16.mxu0 0
      %724 = vmatpush2.bf16.msra.mxu0 0
      %725 = vmatprep.mubr.bf16.mxu0 0
      %726 = vmatmul.mubr.bf16.gmra.mxu0 %v691
      %v727 = vpop.f32.mrf.mxu0
      %v728 = vadd.f32 %v676, %v727
      %v729 = vpop.f32.mrf.mxu0
      %v730 = vpop.f32.mrf.mxu0
      %v731 = vadd.f32 %v676, %v730
      %v732 = vpop.f32.mrf.mxu0
      %733 = vdwg.mxu0
      %v734 = vadd.f32 %v728, %v282
      %v735 = vadd.f32 %v731, %v283
      %v736 = vpack.c.bf16 %v735, %v734
      %v738 = vunpack.c.l.b16 %v736
      %v739 = vunpack.c.h.b16 %v736
      %v740 = vpack.c.b16 %v738, %v738
      %v741 = vpack.c.b16 %v739, %v739
      %vm744 = vcmask 257024
      %745 = vst.msk [vmem:[%s278] sm:$0xf] %vm744, %v740
      %746 = vst.msk [vmem:[%s278 + $0x4] sm:$0xf] %vm744, %v741
      %p747 = scmp.lt.s32.totalorder %s18, 1
      %s748 = scalar_select %p747, %s18, 1
      %s749 = smul.addr %s748, 2
      %s750 = smul.addr %s749, 4
      %s751 = scalar_lea.vmem %s7, %s750
      // Predicated region
      $region49: #{transformer_forward.7} parent=47 // pred_check
        %p752 = pneg %p188
      $region50: #{transformer_forward.7} parent=47 // pred_check_branch
        %754 = sbr.rel (%p752) target = $region52
      $region51: #{transformer_forward.7} parent=47 // pred_region
        _
      $region52: #{transformer_forward.7} parent=47 // pred_fallthru
        _
    $region48: #{transformer_forward.7} parent=5 // pred_fallthru
      _
    %p755 = scmp.le.s32.totalorder 2, %s13
    // Predicated region
    $region53: #{transformer_forward.7} parent=5 // pred_check
      %p756 = pneg %p755
    $region54: #{transformer_forward.7} parent=5 // pred_check_branch
      %758 = sbr.rel (%p756) target = $region56
    $region55: #{transformer_forward.7} parent=5 // pred_region
      %s759 = ssub.s32 %s13, 2
      // Predicated region
      $region57: #{transformer_forward.7} parent=55 // pred_check
        %p760 = pneg %p194
      $region58: #{transformer_forward.7} parent=55 // pred_check_branch
        %762 = sbr.rel (%p760) target = $region60
      $region59: #{transformer_forward.7} parent=55 // pred_region
        %p763 = scmp.lt.s32.totalorder %s19, 1
        %s764 = scalar_select %p763, %s19, 1
        %s765 = smul.addr %s764, 2
        %s766 = smul.addr %s765, 4
        %s767 = scalar_lea.vmem %s7, %s766
      $region60: #{transformer_forward.7} parent=55 // pred_fallthru
        _
    $region56: #{transformer_forward.7} parent=5 // pred_fallthru
      _
  $region6: #{transformer_forward.7} parent=0 // loop_footer
    %s17 = sadd.s32 1, %s13
  $region7: #{transformer_forward.7} parent=0 // loop_footer_branch
    %12 = sbr.rel target = $region3
  $region8: #{transformer_forward.7} parent=0 // loop_exit
    _

</llo_original>
